<compile_context>
chip_gen: v7x
topology: tpu7x:2x2x1
jax: 0.10.0
libtpu: 0.0.40
codegen_flags: <defaults>
</compile_context>

<pallas_src>
import functools
import math

import jax
import jax.numpy as jnp
from jax import lax
from jax.experimental import pallas as pl
from jax.experimental.pallas import tpu as pltpu


def _mha_kernel(q_ref, k_ref, v_ref,
                wq_ref, bq_ref, wk_ref, bk_ref, wv_ref, bv_ref,
                wo_ref, bo_ref,
                out_ref, *rest,
                n_heads, head_size, compute_dtype, emit_attn):
    """One (batch, q-tile) grid step.

    q-tile 0: project K and V for this batch element with full-width
              (S, H) @ (H, nH*d) matmuls and stash them in VMEM scratch.
    every tile: full-width Q projection of the tile, per-head exact-softmax
              attention against the cached K/V, per-head contexts written into
              a VMEM buffer, single full-width output projection.
    """
    if emit_attn:
        attn_ref, kp_ref, vp_ref, ctx_ref = rest
    else:
        kp_ref, vp_ref, ctx_ref = rest

    f32 = jnp.float32
    cd = compute_dtype
    d = head_size
    qi = pl.program_id(1)

    # --- K / V projections: once per batch element, cached across q tiles ---
    @pl.when(qi == 0)
    def _():
        kk = k_ref[0].astype(cd)                                   # (S, H)
        vv = v_ref[0].astype(cd)
        kp = jnp.dot(kk, wk_ref[...].astype(cd),
                     preferred_element_type=f32) + bk_ref[...]     # (S, P)
        vp = jnp.dot(vv, wv_ref[...].astype(cd),
                     preferred_element_type=f32) + bv_ref[...]
        kp_ref[...] = kp.astype(cd)
        vp_ref[...] = vp.astype(cd)

    # --- Q projection for this tile (1/sqrt(d) pre-folded into wq/bq) ---
    qq = q_ref[0].astype(cd)                                       # (tq, H)
    qp = (jnp.dot(qq, wq_ref[...].astype(cd),
                  preferred_element_type=f32) + bq_ref[...]).astype(cd)

    # --- per-head exact-softmax attention (static unroll, static slices) ---
    for h in range(n_heads):
        sl = slice(h * d, (h + 1) * d)
        qh = qp[:, sl]                                             # (tq, d)
        kh = kp_ref[:, sl]                                         # (S, d)
        vh = vp_ref[:, sl]

        # scores = qh @ kh^T via contraction dims (no materialized transpose)
        scores = lax.dot_general(qh, kh,
                                 dimension_numbers=(((1,), (1,)), ((), ())),
                                 preferred_element_type=f32)       # (tq, S)
        m = jnp.max(scores, axis=-1, keepdims=True)
        e = jnp.exp(scores - m)
        denom = jnp.sum(e, axis=-1, keepdims=True)
        if emit_attn:
            attn = e / denom                      # exact: stored weights sum to 1
            attn_ref[0, h] = attn.astype(attn_ref.dtype)
        else:
            attn = e * pl.reciprocal(denom, approx=True)   # EUP slot, free-ish

        ctx_h = jnp.dot(attn.astype(cd), vh,
                        preferred_element_type=f32)                # (tq, d)
        ctx_ref[:, sl] = ctx_h.astype(cd)

    # --- single full-width output projection ---
    out = jnp.dot(ctx_ref[...], wo_ref[...].astype(cd),
                  preferred_element_type=f32) + bo_ref[...]        # (tq, H)
    out_ref[0] = out.astype(out_ref.dtype)


def prepare_params(params, *, head_size, compute_dtype=jnp.bfloat16):
    """Fold 1/sqrt(head_size) into W_q/b_q and cast the weight matrices to the
    MXU compute dtype. Call ONCE per weight set (not per forward call)."""
    wq, bq, wk, bk, wv, bv, wo, bo = params
    scale = 1.0 / math.sqrt(head_size)
    f32 = jnp.float32
    return ((wq.astype(f32) * scale).astype(compute_dtype),
            (bq.astype(f32) * scale),
            wk.astype(compute_dtype), bk.astype(f32),
            wv.astype(compute_dtype), bv.astype(f32),
            wo.astype(compute_dtype), bo.astype(f32))


def _vmem_limit_bytes(*, S, H, P, tq, n_heads, compute_dtype, out_dtype,
                      attn_dtype, emit_attn):
    """Derive the scoped-VMEM limit from the actual (double-buffered) blocks."""
    cdi = jnp.dtype(compute_dtype).itemsize
    total = 0
    total += 2 * tq * H * cdi                                  # q tile
    total += 2 * 2 * S * H * cdi                               # k, v
    total += 2 * 4 * H * P * cdi                               # wq/wk/wv/wo
    total += 2 * (3 * P + H) * 4                               # biases (f32)
    total += 2 * tq * H * jnp.dtype(out_dtype).itemsize        # out tile
    if emit_attn:
        total += 2 * n_heads * tq * S * jnp.dtype(attn_dtype).itemsize
    total += 2 * S * P * cdi + tq * P * cdi                    # kp/vp/ctx scratch
    total += 4 * tq * S * 4                                    # in-kernel temps
    total = int(total * 1.5) + (4 << 20)                       # compiler slack
    return max(16 << 20, min(total, 100 << 20))


def multi_head_attention(q, k, v, prepared_params, *, n_heads, head_size,
                         compute_dtype=jnp.bfloat16,
                         return_attn_weights=True,
                         attn_dtype=None,
                         q_tile=None):
    """Fused forward of MultiHeadAttentionFromPretrained (default path).

    prepared_params: output of prepare_params() — scale pre-folded into
    W_q/b_q; weights (in_features, out_features), biases (1, out_features).

    Returns (output (B,S,H), attn_weights (B,nH,S,S)) or just the output when
    return_attn_weights=False.
    """
    # TODO(synk): attn_mask path (masked_fill_(mask, -1e9)) and the precomputed
    # attn_weights path (context = attn_weights @ v_s) are not fused here;
    # only the default forward path is implemented.
    B, S, H = q.shape
    d = head_size
    P = n_heads * d
    wq, bq, wk, bk, wv, bv, wo, bo = prepared_params

    out_dtype = q.dtype
    if attn_dtype is None:
        attn_dtype = out_dtype          # pass jnp.bfloat16 to halve HBM traffic

    if q_tile is None:
        q_tile = 256 if (S % 256 == 0) else S
    assert S % q_tile == 0, "S must be divisible by q_tile"
    n_qt = S // q_tile

    # Cast activations once on the host side so the VMEM input blocks are
    # compute-dtype sized (bf16 halves q/k/v traffic on v5e/v6e/v7x).
    if q.dtype != compute_dtype:
        q = q.astype(compute_dtype)
        k = k.astype(compute_dtype)
        v = v.astype(compute_dtype)

    emit_attn = return_attn_weights
    kernel = functools.partial(
        _mha_kernel, n_heads=n_heads, head_size=head_size,
        compute_dtype=compute_dtype, emit_attn=emit_attn)

    qmap = lambda b, t: (b, t, 0)
    kvmap = lambda b, t: (b, 0, 0)       # constant across q tiles -> no re-DMA
    wmap = lambda b, t: (0, 0)

    in_specs = [
        pl.BlockSpec((1, q_tile, H), qmap),      # q tile
        pl.BlockSpec((1, S, H), kvmap),          # k (full seq, shared by tiles)
        pl.BlockSpec((1, S, H), kvmap),          # v
        pl.BlockSpec((H, P), wmap),              # W_q (scale folded)
        pl.BlockSpec((1, P), wmap),              # b_q (scale folded)
        pl.BlockSpec((H, P), wmap),              # W_k
        pl.BlockSpec((1, P), wmap),              # b_k
        pl.BlockSpec((H, P), wmap),              # W_v
        pl.BlockSpec((1, P), wmap),              # b_v
        pl.BlockSpec((P, H), wmap),              # W_o
        pl.BlockSpec((1, H), wmap),              # b_o
    ]

    out_spec_o = pl.BlockSpec((1, q_tile, H), qmap)
    if emit_attn:
        out_shape = (jax.ShapeDtypeStruct((B, S, H), out_dtype),
                     jax.ShapeDtypeStruct((B, n_heads, S, S), attn_dtype))
        out_specs = [out_spec_o,
                     pl.BlockSpec((1, n_heads, q_tile, S),
                                  lambda b, t: (b, 0, t, 0))]
    else:
        out_shape = jax.ShapeDtypeStruct((B, S, H), out_dtype)
        out_specs = out_spec_o

    vmem_limit = _vmem_limit_bytes(
        S=S, H=H, P=P, tq=q_tile, n_heads=n_heads,
        compute_dtype=compute_dtype, out_dtype=out_dtype,
        attn_dtype=attn_dtype, emit_attn=emit_attn)

    return pl.pallas_call(
        kernel,
        out_shape=out_shape,
        grid_spec=pltpu.PrefetchScalarGridSpec(
            num_scalar_prefetch=0,
            grid=(B, n_qt),
            in_specs=in_specs,
            out_specs=out_specs,
            scratch_shapes=[
                pltpu.VMEM((S, P), compute_dtype),        # projected K cache
                pltpu.VMEM((S, P), compute_dtype),        # projected V cache
                pltpu.VMEM((q_tile, P), compute_dtype),   # per-tile context
            ],
        ),
        compiler_params=pltpu.CompilerParams(
            # Batch axis megacore-parallel; the q-tile axis carries the cached
            # K/V-projection dependency (computed at tile 0) so it stays
            # "arbitrary".
            # TODO(synk): for v7x dual-TC with B==1, split the q-tile axis into
            # two parallel groups (recomputing K/V per group) instead.
            dimension_semantics=("parallel", "arbitrary"),
            vmem_limit_bytes=vmem_limit,
        ),
    )(q, k, v, wq, bq, wk, bk, wv, bv, wo, bo)


def _reference(q, k, v, params, *, n_heads, head_size):
    """Pure-JAX reference mirroring the PyTorch module (attn_mask=None)."""
    wq, bq, wk, bk, wv, bv, wo, bo = params
    B, S, H = q.shape
    hp = lax.Precision.HIGHEST

    def proj(x, w, b):
        y = jnp.dot(x, w, precision=hp) + b                      # (B, S, nH*d)
        return y.reshape(B, S, n_heads, head_size).transpose(0, 2, 1, 3)

    qs, ks, vs = proj(q, wq, bq), proj(k, wk, bk), proj(v, wv, bv)
    scores = jnp.einsum("bhqd,bhkd->bhqk", qs, ks,
                        precision=hp) / math.sqrt(head_size)
    attn = jax.nn.softmax(scores, axis=-1)
    ctx = jnp.einsum("bhqk,bhkd->bhqd", attn, vs, precision=hp)
    ctx = ctx.transpose(0, 2, 1, 3).reshape(B, S, n_heads * head_size)
    out = jnp.dot(ctx, wo, precision=hp) + bo
    return out, attn


if __name__ == "__main__":
    # Small shapes consistent with the module's forward.
    B, S, hidden, head_size, n_heads = 2, 8, 32, 16, 4
    Hnh = n_heads * head_size

    key = jax.random.PRNGKey(0)
    keys = jax.random.split(key, 16)

    q = jax.random.normal(keys[0], (B, S, hidden), jnp.float32)
    k = jax.random.normal(keys[1], (B, S, hidden), jnp.float32)
    v = jax.random.normal(keys[2], (B, S, hidden), jnp.float32)

    def init_linear(kw, kb, fan_in, fan_out):
        # Deterministic init (shapes from nn.Linear); weight stored as (in, out).
        bound = 1.0 / math.sqrt(fan_in)
        w = jax.random.uniform(kw, (fan_in, fan_out), jnp.float32, -bound, bound)
        b = jax.random.uniform(kb, (1, fan_out), jnp.float32, -bound, bound)
        return w, b

    wq, bq = init_linear(keys[3], keys[4], hidden, Hnh)
    wk, bk = init_linear(keys[5], keys[6], hidden, Hnh)
    wv, bv = init_linear(keys[7], keys[8], hidden, Hnh)
    wo, bo = init_linear(keys[9], keys[10], Hnh, hidden)
    params = (wq, bq, wk, bk, wv, bv, wo, bo)

    out_ref, attn_ref_ = _reference(q, k, v, params,
                                    n_heads=n_heads, head_size=head_size)

    # ---- f32 MXU-operand path (tighter numerics) ----
    pp32 = prepare_params(params, head_size=head_size,
                          compute_dtype=jnp.float32)
    out32, attn32 = multi_head_attention(q, k, v, pp32, n_heads=n_heads,
                                         head_size=head_size,
                                         compute_dtype=jnp.float32)

    # ---- default bf16 MXU-operand path ----
    ppbf = prepare_params(params, head_size=head_size)        # bf16 weights
    outbf, attnbf = multi_head_attention(q, k, v, ppbf, n_heads=n_heads,
                                         head_size=head_size)

    # ---- no attention-weights writeback path ----
    out_na = multi_head_attention(q, k, v, ppbf, n_heads=n_heads,
                                  head_size=head_size,
                                  return_attn_weights=False)

    # ---- multi q-tile path (exercises the cached K/V projection scratch) ----
    S2 = 16
    q2 = jax.random.normal(keys[11], (B, S2, hidden), jnp.float32)
    k2 = jax.random.normal(keys[12], (B, S2, hidden), jnp.float32)
    v2 = jax.random.normal(keys[13], (B, S2, hidden), jnp.float32)
    out2, attn2 = multi_head_attention(q2, k2, v2, ppbf, n_heads=n_heads,
                                       head_size=head_size, q_tile=8)
    out2_ref, attn2_ref = _reference(q2, k2, v2, params,
                                     n_heads=n_heads, head_size=head_size)

    jax.block_until_ready((out32, attn32, outbf, attnbf, out_na, out2, attn2))

    assert out32.shape == (B, S, hidden)
    assert attn32.shape == (B, n_heads, S, S)
    assert jnp.allclose(out32, out_ref, atol=1e-2, rtol=1e-2)
    assert jnp.allclose(attn32, attn_ref_, atol=1e-2, rtol=1e-2)

    assert jnp.allclose(outbf, out_ref, atol=5e-2, rtol=5e-2)
    assert jnp.allclose(attnbf, attn_ref_, atol=5e-2, rtol=5e-2)
    assert jnp.allclose(out_na, out_ref, atol=5e-2, rtol=5e-2)

    assert out2.shape == (B, S2, hidden)
    assert attn2.shape == (B, n_heads, S2, S2)
    assert jnp.allclose(out2, out2_ref, atol=5e-2, rtol=5e-2)
    assert jnp.allclose(attn2, attn2_ref, atol=5e-2, rtol=5e-2)

    print("KERNEL_OK")
</pallas_src>

<mosaic_0001>
module attributes {stable_mosaic.version = 11 : i64} {
  func.func @_mha_kernel(%arg0: i32, %arg1: i32, %arg2: memref<1x8x32xf32, #tpu.memory_space<vmem>>, %arg3: memref<1x8x32xf32, #tpu.memory_space<vmem>>, %arg4: memref<1x8x32xf32, #tpu.memory_space<vmem>>, %arg5: memref<32x64xf32, #tpu.memory_space<vmem>>, %arg6: memref<1x64xf32, #tpu.memory_space<vmem>>, %arg7: memref<32x64xf32, #tpu.memory_space<vmem>>, %arg8: memref<1x64xf32, #tpu.memory_space<vmem>>, %arg9: memref<32x64xf32, #tpu.memory_space<vmem>>, %arg10: memref<1x64xf32, #tpu.memory_space<vmem>>, %arg11: memref<64x32xf32, #tpu.memory_space<vmem>>, %arg12: memref<1x32xf32, #tpu.memory_space<vmem>>, %arg13: memref<1x8x32xf32, #tpu.memory_space<vmem>>, %arg14: memref<1x4x8x8xf32, #tpu.memory_space<vmem>>, %arg15: memref<8x64xf32, #tpu.memory_space<vmem>>, %arg16: memref<8x64xf32, #tpu.memory_space<vmem>>, %arg17: memref<8x64xf32, #tpu.memory_space<vmem>>) attributes {dimension_semantics = [#tpu.dimension_semantics<parallel>, #tpu.dimension_semantics<arbitrary>], iteration_bounds = array<i64: 2, 1>, scalar_prefetch = 0 : i64, scratch_operands = 3 : i64, tpu.core_type = #tpu.core_type<tc>, window_params = [{transform_indices = @transform_0, window_bounds = array<i64: 1, 8, 32>}, {transform_indices = @transform_1, window_bounds = array<i64: 1, 8, 32>}, {transform_indices = @transform_2, window_bounds = array<i64: 1, 8, 32>}, {pipeline_mode = #tpu.pipeline_mode<synchronous>, transform_indices = @transform_3, window_bounds = array<i64: 32, 64>}, {pipeline_mode = #tpu.pipeline_mode<synchronous>, transform_indices = @transform_4, window_bounds = array<i64: 1, 64>}, {pipeline_mode = #tpu.pipeline_mode<synchronous>, transform_indices = @transform_5, window_bounds = array<i64: 32, 64>}, {pipeline_mode = #tpu.pipeline_mode<synchronous>, transform_indices = @transform_6, window_bounds = array<i64: 1, 64>}, {pipeline_mode = #tpu.pipeline_mode<synchronous>, transform_indices = @transform_7, window_bounds = array<i64: 32, 64>}, {pipeline_mode = #tpu.pipeline_mode<synchronous>, transform_indices = @transform_8, window_bounds = array<i64: 1, 64>}, {pipeline_mode = #tpu.pipeline_mode<synchronous>, transform_indices = @transform_9, window_bounds = array<i64: 64, 32>}, {pipeline_mode = #tpu.pipeline_mode<synchronous>, transform_indices = @transform_10, window_bounds = array<i64: 1, 32>}, {transform_indices = @transform_11, window_bounds = array<i64: 1, 8, 32>}, {transform_indices = @transform_12, window_bounds = array<i64: 1, 4, 8, 8>}]} {
    %c0_i32 = arith.constant 0 : i32
    %0 = arith.cmpi eq, %arg1, %c0_i32 : i32
    %1 = arith.extui %0 : i1 to i32
    %c0_i32_0 = arith.constant 0 : i32
    %2 = arith.cmpi ne, %1, %c0_i32_0 : i32
    scf.if %2 {
      %c0_67 = arith.constant 0 : index
      %c0_68 = arith.constant 0 : index
      %c0_69 = arith.constant 0 : index
      %91 = vector.load %arg3[%c0_67, %c0_68, %c0_69] : memref<1x8x32xf32, #tpu.memory_space<vmem>>, vector<1x8x32xf32>
      %92 = vector.shape_cast %91 : vector<1x8x32xf32> to vector<8x32xf32>
      %c0_70 = arith.constant 0 : index
      %c0_71 = arith.constant 0 : index
      %c0_72 = arith.constant 0 : index
      %93 = vector.load %arg4[%c0_70, %c0_71, %c0_72] : memref<1x8x32xf32, #tpu.memory_space<vmem>>, vector<1x8x32xf32>
      %94 = vector.shape_cast %93 : vector<1x8x32xf32> to vector<8x32xf32>
      %c0_73 = arith.constant 0 : index
      %c0_74 = arith.constant 0 : index
      %95 = vector.load %arg7[%c0_73, %c0_74] : memref<32x64xf32, #tpu.memory_space<vmem>>, vector<32x64xf32>
      %cst_75 = arith.constant dense<0.000000e+00> : vector<8x64xf32>
      %96 = tpu.matmul %92, %95, %cst_75 {dimension_numbers = #tpu.dot_dimension_numbers<[1], [0], [0], [1], [0, 0, 1, 1], [], []>} : vector<8x32xf32>, vector<32x64xf32>, vector<8x64xf32> -> vector<8x64xf32>
      %c0_76 = arith.constant 0 : index
      %c0_77 = arith.constant 0 : index
      %97 = vector.load %arg8[%c0_76, %c0_77] : memref<1x64xf32, #tpu.memory_space<vmem>>, vector<1x64xf32>
      %98 = vector.broadcast %97 : vector<1x64xf32> to vector<8x64xf32>
      %99 = arith.addf %96, %98 : vector<8x64xf32>
      %c0_78 = arith.constant 0 : index
      %c0_79 = arith.constant 0 : index
      %100 = vector.load %arg9[%c0_78, %c0_79] : memref<32x64xf32, #tpu.memory_space<vmem>>, vector<32x64xf32>
      %cst_80 = arith.constant dense<0.000000e+00> : vector<8x64xf32>
      %101 = tpu.matmul %94, %100, %cst_80 {dimension_numbers = #tpu.dot_dimension_numbers<[1], [0], [0], [1], [0, 0, 1, 1], [], []>} : vector<8x32xf32>, vector<32x64xf32>, vector<8x64xf32> -> vector<8x64xf32>
      %c0_81 = arith.constant 0 : index
      %c0_82 = arith.constant 0 : index
      %102 = vector.load %arg10[%c0_81, %c0_82] : memref<1x64xf32, #tpu.memory_space<vmem>>, vector<1x64xf32>
      %103 = vector.broadcast %102 : vector<1x64xf32> to vector<8x64xf32>
      %104 = arith.addf %101, %103 : vector<8x64xf32>
      %c0_83 = arith.constant 0 : index
      %c0_84 = arith.constant 0 : index
      %105 = vector.load %arg15[%c0_83, %c0_84] : memref<8x64xf32, #tpu.memory_space<vmem>>, vector<8x64xf32>
      tpu.vector_store %arg15[%c0_83, %c0_84], %99 {strides = array<i32>} : memref<8x64xf32, #tpu.memory_space<vmem>>, vector<8x64xf32>,
      %c0_85 = arith.constant 0 : index
      %c0_86 = arith.constant 0 : index
      %106 = vector.load %arg16[%c0_85, %c0_86] : memref<8x64xf32, #tpu.memory_space<vmem>>, vector<8x64xf32>
      tpu.vector_store %arg16[%c0_85, %c0_86], %104 {strides = array<i32>} : memref<8x64xf32, #tpu.memory_space<vmem>>, vector<8x64xf32>,
    } else {
    }
    %c0 = arith.constant 0 : index
    %c0_1 = arith.constant 0 : index
    %c0_2 = arith.constant 0 : index
    %3 = vector.load %arg2[%c0, %c0_1, %c0_2] : memref<1x8x32xf32, #tpu.memory_space<vmem>>, vector<1x8x32xf32>
    %4 = vector.shape_cast %3 : vector<1x8x32xf32> to vector<8x32xf32>
    %c0_3 = arith.constant 0 : index
    %c0_4 = arith.constant 0 : index
    %5 = vector.load %arg5[%c0_3, %c0_4] : memref<32x64xf32, #tpu.memory_space<vmem>>, vector<32x64xf32>
    %cst = arith.constant dense<0.000000e+00> : vector<8x64xf32>
    %6 = tpu.matmul %4, %5, %cst {dimension_numbers = #tpu.dot_dimension_numbers<[1], [0], [0], [1], [0, 0, 1, 1], [], []>} : vector<8x32xf32>, vector<32x64xf32>, vector<8x64xf32> -> vector<8x64xf32>
    %c0_5 = arith.constant 0 : index
    %c0_6 = arith.constant 0 : index
    %7 = vector.load %arg6[%c0_5, %c0_6] : memref<1x64xf32, #tpu.memory_space<vmem>>, vector<1x64xf32>
    %8 = vector.broadcast %7 : vector<1x64xf32> to vector<8x64xf32>
    %9 = arith.addf %6, %8 : vector<8x64xf32>
    %10 = vector.extract_strided_slice %9 {offsets = [0, 0], sizes = [8, 16], strides = [1, 1]} : vector<8x64xf32> to vector<8x16xf32>
    %c0_7 = arith.constant 0 : index
    %c0_8 = arith.constant 0 : index
    %11 = vector.load %arg15[%c0_7, %c0_8] : memref<8x64xf32, #tpu.memory_space<vmem>>, vector<8x16xf32>
    %c0_9 = arith.constant 0 : index
    %c0_10 = arith.constant 0 : index
    %12 = vector.load %arg16[%c0_9, %c0_10] : memref<8x64xf32, #tpu.memory_space<vmem>>, vector<8x16xf32>
    %cst_11 = arith.constant dense<0.000000e+00> : vector<8x8xf32>
    %13 = tpu.matmul %10, %11, %cst_11 {dimension_numbers = #tpu.dot_dimension_numbers<[1], [1], [0], [0], [0, 0, 1, 0], [], []>} : vector<8x16xf32>, vector<8x16xf32>, vector<8x8xf32> -> vector<8x8xf32>
    %cst_12 = arith.constant dense<0xFF800000> : vector<8xf32>
    %14 = vector.multi_reduction <maximumf>, %13, %cst_12 [1] : vector<8x8xf32> to vector<8xf32>
    %15 = vector.shape_cast %14 : vector<8xf32> to vector<8x1xf32>
    %16 = vector.broadcast %15 : vector<8x1xf32> to vector<8x8xf32>
    %17 = arith.subf %13, %16 : vector<8x8xf32>
    %18 = math.exp %17 : vector<8x8xf32>
    %cst_13 = arith.constant dense<0.000000e+00> : vector<8xf32>
    %19 = vector.multi_reduction <add>, %18, %cst_13 [1] : vector<8x8xf32> to vector<8xf32>
    %20 = vector.shape_cast %19 : vector<8xf32> to vector<8x1xf32>
    %21 = vector.broadcast %20 : vector<8x1xf32> to vector<8x8xf32>
    %22 = arith.divf %18, %21 : vector<8x8xf32>
    %c0_14 = arith.constant 0 : index
    %c0_15 = arith.constant 0 : index
    %c0_16 = arith.constant 0 : index
    %c0_17 = arith.constant 0 : index
    %23 = vector.load %arg14[%c0_14, %c0_15, %c0_16, %c0_17] : memref<1x4x8x8xf32, #tpu.memory_space<vmem>>, vector<1x1x8x8xf32>
    %24 = vector.shape_cast %23 : vector<1x1x8x8xf32> to vector<8x8xf32>
    %25 = vector.shape_cast %22 : vector<8x8xf32> to vector<1x1x8x8xf32>
    tpu.vector_store %arg14[%c0_14, %c0_15, %c0_16, %c0_17], %25 {strides = array<i32>} : memref<1x4x8x8xf32, #tpu.memory_space<vmem>>, vector<1x1x8x8xf32>,
    %cst_18 = arith.constant dense<0.000000e+00> : vector<8x16xf32>
    %26 = tpu.matmul %22, %12, %cst_18 {dimension_numbers = #tpu.dot_dimension_numbers<[1], [0], [0], [1], [0, 0, 1, 1], [], []>} : vector<8x8xf32>, vector<8x16xf32>, vector<8x16xf32> -> vector<8x16xf32>
    %c0_19 = arith.constant 0 : index
    %c0_20 = arith.constant 0 : index
    %27 = vector.load %arg17[%c0_19, %c0_20] : memref<8x64xf32, #tpu.memory_space<vmem>>, vector<8x16xf32>
    tpu.vector_store %arg17[%c0_19, %c0_20], %26 {strides = array<i32>} : memref<8x64xf32, #tpu.memory_space<vmem>>, vector<8x16xf32>,
    %28 = vector.extract_strided_slice %9 {offsets = [0, 16], sizes = [8, 16], strides = [1, 1]} : vector<8x64xf32> to vector<8x16xf32>
    %c0_21 = arith.constant 0 : index
    %c16 = arith.constant 16 : index
    %29 = vector.load %arg15[%c0_21, %c16] : memref<8x64xf32, #tpu.memory_space<vmem>>, vector<8x16xf32>
    %c0_22 = arith.constant 0 : index
    %c16_23 = arith.constant 16 : index
    %30 = vector.load %arg16[%c0_22, %c16_23] : memref<8x64xf32, #tpu.memory_space<vmem>>, vector<8x16xf32>
    %cst_24 = arith.constant dense<0.000000e+00> : vector<8x8xf32>
    %31 = tpu.matmul %28, %29, %cst_24 {dimension_numbers = #tpu.dot_dimension_numbers<[1], [1], [0], [0], [0, 0, 1, 0], [], []>} : vector<8x16xf32>, vector<8x16xf32>, vector<8x8xf32> -> vector<8x8xf32>
    %cst_25 = arith.constant dense<0xFF800000> : vector<8xf32>
    %32 = vector.multi_reduction <maximumf>, %31, %cst_25 [1] : vector<8x8xf32> to vector<8xf32>
    %33 = vector.shape_cast %32 : vector<8xf32> to vector<8x1xf32>
    %34 = vector.broadcast %33 : vector<8x1xf32> to vector<8x8xf32>
    %35 = arith.subf %31, %34 : vector<8x8xf32>
    %36 = math.exp %35 : vector<8x8xf32>
    %cst_26 = arith.constant dense<0.000000e+00> : vector<8xf32>
    %37 = vector.multi_reduction <add>, %36, %cst_26 [1] : vector<8x8xf32> to vector<8xf32>
    %38 = vector.shape_cast %37 : vector<8xf32> to vector<8x1xf32>
    %39 = vector.broadcast %38 : vector<8x1xf32> to vector<8x8xf32>
    %40 = arith.divf %36, %39 : vector<8x8xf32>
    %c0_27 = arith.constant 0 : index
    %c1 = arith.constant 1 : index
    %c0_28 = arith.constant 0 : index
    %c0_29 = arith.constant 0 : index
    %41 = vector.load %arg14[%c0_27, %c1, %c0_28, %c0_29] : memref<1x4x8x8xf32, #tpu.memory_space<vmem>>, vector<1x1x8x8xf32>
    %42 = vector.shape_cast %41 : vector<1x1x8x8xf32> to vector<8x8xf32>
    %43 = vector.shape_cast %40 : vector<8x8xf32> to vector<1x1x8x8xf32>
    tpu.vector_store %arg14[%c0_27, %c1, %c0_28, %c0_29], %43 {strides = array<i32>} : memref<1x4x8x8xf32, #tpu.memory_space<vmem>>, vector<1x1x8x8xf32>,
    %cst_30 = arith.constant dense<0.000000e+00> : vector<8x16xf32>
    %44 = tpu.matmul %40, %30, %cst_30 {dimension_numbers = #tpu.dot_dimension_numbers<[1], [0], [0], [1], [0, 0, 1, 1], [], []>} : vector<8x8xf32>, vector<8x16xf32>, vector<8x16xf32> -> vector<8x16xf32>
    %c0_31 = arith.constant 0 : index
    %c16_32 = arith.constant 16 : index
    %45 = vector.load %arg17[%c0_31, %c16_32] : memref<8x64xf32, #tpu.memory_space<vmem>>, vector<8x16xf32>
    tpu.vector_store %arg17[%c0_31, %c16_32], %44 {strides = array<i32>} : memref<8x64xf32, #tpu.memory_space<vmem>>, vector<8x16xf32>,
    %46 = vector.extract_strided_slice %9 {offsets = [0, 32], sizes = [8, 16], strides = [1, 1]} : vector<8x64xf32> to vector<8x16xf32>
    %c0_33 = arith.constant 0 : index
    %c32 = arith.constant 32 : index
    %47 = vector.load %arg15[%c0_33, %c32] : memref<8x64xf32, #tpu.memory_space<vmem>>, vector<8x16xf32>
    %c0_34 = arith.constant 0 : index
    %c32_35 = arith.constant 32 : index
    %48 = vector.load %arg16[%c0_34, %c32_35] : memref<8x64xf32, #tpu.memory_space<vmem>>, vector<8x16xf32>
    %cst_36 = arith.constant dense<0.000000e+00> : vector<8x8xf32>
    %49 = tpu.matmul %46, %47, %cst_36 {dimension_numbers = #tpu.dot_dimension_numbers<[1], [1], [0], [0], [0, 0, 1, 0], [], []>} : vector<8x16xf32>, vector<8x16xf32>, vector<8x8xf32> -> vector<8x8xf32>
    %cst_37 = arith.constant dense<0xFF800000> : vector<8xf32>
    %50 = vector.multi_reduction <maximumf>, %49, %cst_37 [1] : vector<8x8xf32> to vector<8xf32>
    %51 = vector.shape_cast %50 : vector<8xf32> to vector<8x1xf32>
    %52 = vector.broadcast %51 : vector<8x1xf32> to vector<8x8xf32>
    %53 = arith.subf %49, %52 : vector<8x8xf32>
    %54 = math.exp %53 : vector<8x8xf32>
    %cst_38 = arith.constant dense<0.000000e+00> : vector<8xf32>
    %55 = vector.multi_reduction <add>, %54, %cst_38 [1] : vector<8x8xf32> to vector<8xf32>
    %56 = vector.shape_cast %55 : vector<8xf32> to vector<8x1xf32>
    %57 = vector.broadcast %56 : vector<8x1xf32> to vector<8x8xf32>
    %58 = arith.divf %54, %57 : vector<8x8xf32>
    %c0_39 = arith.constant 0 : index
    %c2 = arith.constant 2 : index
    %c0_40 = arith.constant 0 : index
    %c0_41 = arith.constant 0 : index
    %59 = vector.load %arg14[%c0_39, %c2, %c0_40, %c0_41] : memref<1x4x8x8xf32, #tpu.memory_space<vmem>>, vector<1x1x8x8xf32>
    %60 = vector.shape_cast %59 : vector<1x1x8x8xf32> to vector<8x8xf32>
    %61 = vector.shape_cast %58 : vector<8x8xf32> to vector<1x1x8x8xf32>
    tpu.vector_store %arg14[%c0_39, %c2, %c0_40, %c0_41], %61 {strides = array<i32>} : memref<1x4x8x8xf32, #tpu.memory_space<vmem>>, vector<1x1x8x8xf32>,
    %cst_42 = arith.constant dense<0.000000e+00> : vector<8x16xf32>
    %62 = tpu.matmul %58, %48, %cst_42 {dimension_numbers = #tpu.dot_dimension_numbers<[1], [0], [0], [1], [0, 0, 1, 1], [], []>} : vector<8x8xf32>, vector<8x16xf32>, vector<8x16xf32> -> vector<8x16xf32>
    %c0_43 = arith.constant 0 : index
    %c32_44 = arith.constant 32 : index
    %63 = vector.load %arg17[%c0_43, %c32_44] : memref<8x64xf32, #tpu.memory_space<vmem>>, vector<8x16xf32>
    tpu.vector_store %arg17[%c0_43, %c32_44], %62 {strides = array<i32>} : memref<8x64xf32, #tpu.memory_space<vmem>>, vector<8x16xf32>,
    %64 = vector.extract_strided_slice %9 {offsets = [0, 48], sizes = [8, 16], strides = [1, 1]} : vector<8x64xf32> to vector<8x16xf32>
    %c0_45 = arith.constant 0 : index
    %c48 = arith.constant 48 : index
    %65 = vector.load %arg15[%c0_45, %c48] : memref<8x64xf32, #tpu.memory_space<vmem>>, vector<8x16xf32>
    %c0_46 = arith.constant 0 : index
    %c48_47 = arith.constant 48 : index
    %66 = vector.load %arg16[%c0_46, %c48_47] : memref<8x64xf32, #tpu.memory_space<vmem>>, vector<8x16xf32>
    %cst_48 = arith.constant dense<0.000000e+00> : vector<8x8xf32>
    %67 = tpu.matmul %64, %65, %cst_48 {dimension_numbers = #tpu.dot_dimension_numbers<[1], [1], [0], [0], [0, 0, 1, 0], [], []>} : vector<8x16xf32>, vector<8x16xf32>, vector<8x8xf32> -> vector<8x8xf32>
    %cst_49 = arith.constant dense<0xFF800000> : vector<8xf32>
    %68 = vector.multi_reduction <maximumf>, %67, %cst_49 [1] : vector<8x8xf32> to vector<8xf32>
    %69 = vector.shape_cast %68 : vector<8xf32> to vector<8x1xf32>
    %70 = vector.broadcast %69 : vector<8x1xf32> to vector<8x8xf32>
    %71 = arith.subf %67, %70 : vector<8x8xf32>
    %72 = math.exp %71 : vector<8x8xf32>
    %cst_50 = arith.constant dense<0.000000e+00> : vector<8xf32>
    %73 = vector.multi_reduction <add>, %72, %cst_50 [1] : vector<8x8xf32> to vector<8xf32>
    %74 = vector.shape_cast %73 : vector<8xf32> to vector<8x1xf32>
    %75 = vector.broadcast %74 : vector<8x1xf32> to vector<8x8xf32>
    %76 = arith.divf %72, %75 : vector<8x8xf32>
    %c0_51 = arith.constant 0 : index
    %c3 = arith.constant 3 : index
    %c0_52 = arith.constant 0 : index
    %c0_53 = arith.constant 0 : index
    %77 = vector.load %arg14[%c0_51, %c3, %c0_52, %c0_53] : memref<1x4x8x8xf32, #tpu.memory_space<vmem>>, vector<1x1x8x8xf32>
    %78 = vector.shape_cast %77 : vector<1x1x8x8xf32> to vector<8x8xf32>
    %79 = vector.shape_cast %76 : vector<8x8xf32> to vector<1x1x8x8xf32>
    tpu.vector_store %arg14[%c0_51, %c3, %c0_52, %c0_53], %79 {strides = array<i32>} : memref<1x4x8x8xf32, #tpu.memory_space<vmem>>, vector<1x1x8x8xf32>,
    %cst_54 = arith.constant dense<0.000000e+00> : vector<8x16xf32>
    %80 = tpu.matmul %76, %66, %cst_54 {dimension_numbers = #tpu.dot_dimension_numbers<[1], [0], [0], [1], [0, 0, 1, 1], [], []>} : vector<8x8xf32>, vector<8x16xf32>, vector<8x16xf32> -> vector<8x16xf32>
    %c0_55 = arith.constant 0 : index
    %c48_56 = arith.constant 48 : index
    %81 = vector.load %arg17[%c0_55, %c48_56] : memref<8x64xf32, #tpu.memory_space<vmem>>, vector<8x16xf32>
    tpu.vector_store %arg17[%c0_55, %c48_56], %80 {strides = array<i32>} : memref<8x64xf32, #tpu.memory_space<vmem>>, vector<8x16xf32>,
    %c0_57 = arith.constant 0 : index
    %c0_58 = arith.constant 0 : index
    %82 = vector.load %arg17[%c0_57, %c0_58] : memref<8x64xf32, #tpu.memory_space<vmem>>, vector<8x64xf32>
    %c0_59 = arith.constant 0 : index
    %c0_60 = arith.constant 0 : index
    %83 = vector.load %arg11[%c0_59, %c0_60] : memref<64x32xf32, #tpu.memory_space<vmem>>, vector<64x32xf32>
    %cst_61 = arith.constant dense<0.000000e+00> : vector<8x32xf32>
    %84 = tpu.matmul %82, %83, %cst_61 {dimension_numbers = #tpu.dot_dimension_numbers<[1], [0], [0], [1], [0, 0, 1, 1], [], []>} : vector<8x64xf32>, vector<64x32xf32>, vector<8x32xf32> -> vector<8x32xf32>
    %c0_62 = arith.constant 0 : index
    %c0_63 = arith.constant 0 : index
    %85 = vector.load %arg12[%c0_62, %c0_63] : memref<1x32xf32, #tpu.memory_space<vmem>>, vector<1x32xf32>
    %86 = vector.broadcast %85 : vector<1x32xf32> to vector<8x32xf32>
    %87 = arith.addf %84, %86 : vector<8x32xf32>
    %c0_64 = arith.constant 0 : index
    %c0_65 = arith.constant 0 : index
    %c0_66 = arith.constant 0 : index
    %88 = vector.load %arg13[%c0_64, %c0_65, %c0_66] : memref<1x8x32xf32, #tpu.memory_space<vmem>>, vector<1x8x32xf32>
    %89 = vector.shape_cast %88 : vector<1x8x32xf32> to vector<8x32xf32>
    %90 = vector.shape_cast %87 : vector<8x32xf32> to vector<1x8x32xf32>
    tpu.vector_store %arg13[%c0_64, %c0_65, %c0_66], %90 {strides = array<i32>} : memref<1x8x32xf32, #tpu.memory_space<vmem>>, vector<1x8x32xf32>,
    return
  }
  func.func @transform_0(%arg0: i32, %arg1: i32) -> (i32, i32, i32) {
    %c0_i32 = arith.constant 0 : i32
    %c0_i32_0 = arith.constant 0 : i32
    return %arg0, %arg1, %c0_i32 : i32, i32, i32
  }
  func.func @transform_1(%arg0: i32, %arg1: i32) -> (i32, i32, i32) {
    %c0_i32 = arith.constant 0 : i32
    %c0_i32_0 = arith.constant 0 : i32
    %c0_i32_1 = arith.constant 0 : i32
    return %arg0, %c0_i32, %c0_i32_0 : i32, i32, i32
  }
  func.func @transform_2(%arg0: i32, %arg1: i32) -> (i32, i32, i32) {
    %c0_i32 = arith.constant 0 : i32
    %c0_i32_0 = arith.constant 0 : i32
    %c0_i32_1 = arith.constant 0 : i32
    return %arg0, %c0_i32, %c0_i32_0 : i32, i32, i32
  }
  func.func @transform_3(%arg0: i32, %arg1: i32) -> (i32, i32) {
    %c0_i32 = arith.constant 0 : i32
    %c0_i32_0 = arith.constant 0 : i32
    %c0_i32_1 = arith.constant 0 : i32
    return %c0_i32, %c0_i32_0 : i32, i32
  }
  func.func @transform_4(%arg0: i32, %arg1: i32) -> (i32, i32) {
    %c0_i32 = arith.constant 0 : i32
    %c0_i32_0 = arith.constant 0 : i32
    %c0_i32_1 = arith.constant 0 : i32
    return %c0_i32, %c0_i32_0 : i32, i32
  }
  func.func @transform_5(%arg0: i32, %arg1: i32) -> (i32, i32) {
    %c0_i32 = arith.constant 0 : i32
    %c0_i32_0 = arith.constant 0 : i32
    %c0_i32_1 = arith.constant 0 : i32
    return %c0_i32, %c0_i32_0 : i32, i32
  }
  func.func @transform_6(%arg0: i32, %arg1: i32) -> (i32, i32) {
    %c0_i32 = arith.constant 0 : i32
    %c0_i32_0 = arith.constant 0 : i32
    %c0_i32_1 = arith.constant 0 : i32
    return %c0_i32, %c0_i32_0 : i32, i32
  }
  func.func @transform_7(%arg0: i32, %arg1: i32) -> (i32, i32) {
    %c0_i32 = arith.constant 0 : i32
    %c0_i32_0 = arith.constant 0 : i32
    %c0_i32_1 = arith.constant 0 : i32
    return %c0_i32, %c0_i32_0 : i32, i32
  }
  func.func @transform_8(%arg0: i32, %arg1: i32) -> (i32, i32) {
    %c0_i32 = arith.constant 0 : i32
    %c0_i32_0 = arith.constant 0 : i32
    %c0_i32_1 = arith.constant 0 : i32
    return %c0_i32, %c0_i32_0 : i32, i32
  }
  func.func @transform_9(%arg0: i32, %arg1: i32) -> (i32, i32) {
    %c0_i32 = arith.constant 0 : i32
    %c0_i32_0 = arith.constant 0 : i32
    %c0_i32_1 = arith.constant 0 : i32
    return %c0_i32, %c0_i32_0 : i32, i32
  }
  func.func @transform_10(%arg0: i32, %arg1: i32) -> (i32, i32) {
    %c0_i32 = arith.constant 0 : i32
    %c0_i32_0 = arith.constant 0 : i32
    %c0_i32_1 = arith.constant 0 : i32
    return %c0_i32, %c0_i32_0 : i32, i32
  }
  func.func @transform_11(%arg0: i32, %arg1: i32) -> (i32, i32, i32) {
    %c0_i32 = arith.constant 0 : i32
    %c0_i32_0 = arith.constant 0 : i32
    return %arg0, %arg1, %c0_i32 : i32, i32, i32
  }
  func.func @transform_12(%arg0: i32, %arg1: i32) -> (i32, i32, i32, i32) {
    %c0_i32 = arith.constant 0 : i32
    %c0_i32_0 = arith.constant 0 : i32
    %c0_i32_1 = arith.constant 0 : i32
    return %arg0, %c0_i32, %arg1, %c0_i32_0 : i32, i32, i32, i32
  }
}

</mosaic_0001>

<llo_original>
// kernel: tpu_custom_call.1
$region0: #{tpu_custom_call.1}
  #allocation0 [shape = 'u32[]', space=smem, size = 0x4, offset = 0x4, fixed_abs, tag = 'smem constant byte address 0x4 - core index']
  #allocation1 [shape = 'u32[144,128]{1,0:T(1,128)}', space=vmem, size = 0x12000, scoped, tag = 'internal scratch']
  #allocation2 [shape = 'f32[8,64]{1,0:T(8,128)}', space=vmem, size = 0x1000, scoped, tag = 'scratch operand']
  #allocation3 [shape = 'f32[8,64]{1,0:T(8,128)}', space=vmem, size = 0x1000, scoped, tag = 'scratch operand']
  #allocation4 [shape = 'f32[8,64]{1,0:T(8,128)}', space=vmem, size = 0x1000, scoped, tag = 'scratch operand']
  %s0 = inlined_call_operand.hbm [shape: f32[2,8,32], index: 0, kind: input, shape index: {}]
  %s1 = inlined_call_operand.hbm [shape: f32[2,8,32], index: 1, kind: input, shape index: {}]
  %s2 = inlined_call_operand.hbm [shape: f32[2,8,32], index: 2, kind: input, shape index: {}]
  %s3 = inlined_call_operand.vmem [shape: f32[32,64], index: 3, kind: input, shape index: {}]
  %s4 = inlined_call_operand.vmem [shape: f32[1,64], index: 4, kind: input, shape index: {}]
  %s5 = inlined_call_operand.vmem [shape: f32[32,64], index: 5, kind: input, shape index: {}]
  %s6 = inlined_call_operand.vmem [shape: f32[1,64], index: 6, kind: input, shape index: {}]
  %s7 = inlined_call_operand.vmem [shape: f32[32,64], index: 7, kind: input, shape index: {}]
  %s8 = inlined_call_operand.hbm [shape: f32[1,64], index: 8, kind: input, shape index: {}]
  %s9 = inlined_call_operand.vmem [shape: f32[64,32], index: 9, kind: input, shape index: {}]
  %s10 = inlined_call_operand.vmem [shape: f32[1,32], index: 10, kind: input, shape index: {}]
  %s11 = inlined_call_operand.hbm [shape: f32[2,8,32], index: 11, kind: output, shape index: {0}]
  %s12 = inlined_call_operand.hbm [shape: f32[2,4,8,8], index: 12, kind: output, shape index: {1}]
  %13 = xla_tuple %s11, %s12
  %s14 = sld [smem:[#allocation0]]
  $region105: #{tpu_custom_call.1} parent=0
    _
  %s16 = ssub.s32 1, %s14
  %s17 = scalar_select 0, %s16, %s14
  $region1: #{tpu_custom_call.1} parent=0
    #allocation5 [shape = 'u8[8192]{0}', space=vmem, size = 0x2000, scoped, tag = 'input window, operand 0']
    #allocation6 [shape = 's32[2]{0}', space=sflag, size = 0x8, scoped, tag = 'scoped memory for tpu_custom_call.1']
    #allocation7 [shape = 's32[2]{0}', space=sflag, size = 0x8, scoped, tag = 'scoped memory for tpu_custom_call.1']
    #allocation8 [shape = 'u8[8192]{0}', space=vmem, size = 0x2000, scoped, tag = 'input window, operand 1']
    #allocation9 [shape = 's32[2]{0}', space=sflag, size = 0x8, scoped, tag = 'scoped memory for tpu_custom_call.1']
    #allocation10 [shape = 'u8[8192]{0}', space=vmem, size = 0x2000, scoped, tag = 'input window, operand 2']
    #allocation11 [shape = 'u8[512]{0}', space=vmem, size = 0x400, scoped, tag = 'input window, operand 8, single buffered']
    #allocation12 [shape = 's32[1]{0}', space=sflag, size = 0x4, scoped, tag = 'scoped memory for tpu_custom_call.1']
    #allocation13 [shape = 'u8[8192]{0}', space=vmem, size = 0x2000, scoped, tag = 'output window, operand 0']
    #allocation14 [shape = 'u8[32768]{0}', space=vmem, size = 0x8000, scoped, tag = 'output window, operand 1']
    #allocation15 [shape = 's32[2]{0}', space=sflag, size = 0x8, scoped, tag = 'scoped memory for tpu_custom_call.1']
    %18 = vsyncpa [#allocation6], 0
    %s19 = scalar_lea.sflag [#allocation6], 1
    %20 = vsyncpa %s19, 0
    %21 = vsyncpa [#allocation9], 0
    %s22 = scalar_lea.sflag [#allocation9], 1
    %23 = vsyncpa %s22, 0
    %24 = vsyncpa [#allocation12], 0
    %25 = vsyncpa [#allocation7], 0
    %s26 = scalar_lea.sflag [#allocation7], 1
    %27 = vsyncpa %s26, 0
    %28 = vsyncpa [#allocation15], 0
    %s29 = scalar_lea.sflag [#allocation15], 1
    %30 = vsyncpa %s29, 0
    loop: start=0, step=1, limit=4
    $region2: #{tpu_custom_call.1} parent=1 // loop_pre_header
      _
    $region3: #{tpu_custom_call.1} parent=1 // loop_header
      %s32 = sphi 0, %s36
      %p33 = scmp.ge.s32.totalorder %s32, 4
      %s39 = sphi 0, %s51
      %s40 = sphi 0, %s47
      %s41 = sphi 0, %s39
      %s42 = sphi 0, %s40
      %s43 = sphi 0, %s41
      %s44 = sphi 0, %s42
      %s56 = sphi 0, %s58
      %s59 = sphi 0, %s56
      %s60 = sphi 0, %s59
      %s76 = sphi 0, %s60
      %s82 = sphi 0, %s84
      %s85 = sphi 0, %s82
      %s86 = sphi 0, %s85
      %s102 = sphi 0, %s86
      %s108 = sphi 0, %s110
      %s111 = sphi 0, %s108
      %s112 = sphi 0, %s111
      %s128 = sphi 0, %s112
      %s132 = sphi 0, %s132
      %s134 = sphi 0, %s132
      %s135 = sphi 0, %s134
      %s149 = sphi 0, %s135
      %s153 = sphi 0, %s153
      %s155 = sphi 0, %s153
      %s156 = sphi 0, %s155
      %s170 = sphi 0, %s156
      %s174 = sphi 0, %s174
      %s176 = sphi 0, %s174
      %s177 = sphi 0, %s176
      %s191 = sphi 0, %s177
      %s195 = sphi 0, %s195
      %s197 = sphi 0, %s195
      %s198 = sphi 0, %s197
      %s212 = sphi 0, %s198
      %s216 = sphi 0, %s216
      %s218 = sphi 0, %s216
      %s219 = sphi 0, %s218
      %s233 = sphi 0, %s219
      %s237 = sphi 0, %s237
      %s239 = sphi 0, %s237
      %s240 = sphi 0, %s239
      %s254 = sphi 0, %s240
      %s258 = sphi 0, %s258
      %s260 = sphi 0, %s258
      %s261 = sphi 0, %s260
      %s275 = sphi 0, %s261
      %s279 = sphi 0, %s279
      %s281 = sphi 0, %s279
      %s282 = sphi 0, %s281
      %s296 = sphi 0, %s282
      %s304 = sphi 0, %s306
      %s307 = sphi 0, %s304
      %s308 = sphi 0, %s307
      %s324 = sphi 0, %s308
      %s332 = sphi 0, %s334
      %s335 = sphi 0, %s332
      %s336 = sphi 0, %s335
      %s352 = sphi 0, %s336
    $region4: #{tpu_custom_call.1} parent=1 // loop_header_branch
      %35 = sbr.rel (%p33) target = $region8
    $region5: #{tpu_custom_call.1} parent=1 // loop_body
      %s37 = ssub.s32 %s32, 1
      %s38 = ssub.s32 %s32, 2
      %s45 = sadd.s32 1, %s40
      %p46 = scmp.ge.s32.totalorder %s45, 1
      %s47 = scalar_select %p46, 0, %s45
      %s48 = sadd.s32 1, %s39
      %s49 = scalar_select %p46, %s48, %s39
      %p50 = scmp.ge.s32.totalorder %s49, 2
      %s51 = scalar_select %p50, 0, %s49
      %s52 = ssub.s32 %s39, %s51
      %s53 = ssub.s32 %s40, %s47
      %s54 = sor.u32 %s52, %s53
      %p55 = scmp.eq.s32.totalorder %s54, 0
      %s57 = sadd.s32 %s56, 1
      %s58 = scalar_select %p55, %s56, %s57
      %p61 = pneg %p55
      %p62 = scmp.eq.s32.totalorder %s32, 1
      %p63 = por %p61, %p62
      %p64 = scmp.ne.s32.totalorder %s56, %s59
      %p65 = scmp.eq.s32.totalorder %s32, 0
      %p66 = por %p64, %p65
      %p67 = scmp.ne.s32.totalorder %s56, %s59
      %p68 = scmp.eq.s32.totalorder %s37, 1
      %p69 = por %p67, %p68
      %p70 = scmp.ne.s32.totalorder %s59, %s60
      %p71 = scmp.eq.s32.totalorder %s37, 0
      %p72 = por %p70, %p71
      %p73 = scmp.ne.s32.totalorder %s59, %s60
      %p74 = scmp.eq.s32.totalorder %s38, 1
      %p75 = por %p73, %p74
      %p77 = scmp.ne.s32.totalorder %s60, %s76
      %p78 = scmp.eq.s32.totalorder %s38, 0
      %p79 = por %p77, %p78
      %s80 = ssub.s32 %s39, %s51
      %p81 = scmp.eq.s32.totalorder %s80, 0
      %s83 = sadd.s32 %s82, 1
      %s84 = scalar_select %p81, %s82, %s83
      %p87 = pneg %p81
      %p88 = scmp.eq.s32.totalorder %s32, 1
      %p89 = por %p87, %p88
      %p90 = scmp.ne.s32.totalorder %s82, %s85
      %p91 = scmp.eq.s32.totalorder %s32, 0
      %p92 = por %p90, %p91
      %p93 = scmp.ne.s32.totalorder %s82, %s85
      %p94 = scmp.eq.s32.totalorder %s37, 1
      %p95 = por %p93, %p94
      %p96 = scmp.ne.s32.totalorder %s85, %s86
      %p97 = scmp.eq.s32.totalorder %s37, 0
      %p98 = por %p96, %p97
      %p99 = scmp.ne.s32.totalorder %s85, %s86
      %p100 = scmp.eq.s32.totalorder %s38, 1
      %p101 = por %p99, %p100
      %p103 = scmp.ne.s32.totalorder %s86, %s102
      %p104 = scmp.eq.s32.totalorder %s38, 0
      %p105 = por %p103, %p104
      %s106 = ssub.s32 %s39, %s51
      %p107 = scmp.eq.s32.totalorder %s106, 0
      %s109 = sadd.s32 %s108, 1
      %s110 = scalar_select %p107, %s108, %s109
      %p113 = pneg %p107
      %p114 = scmp.eq.s32.totalorder %s32, 1
      %p115 = por %p113, %p114
      %p116 = scmp.ne.s32.totalorder %s108, %s111
      %p117 = scmp.eq.s32.totalorder %s32, 0
      %p118 = por %p116, %p117
      %p119 = scmp.ne.s32.totalorder %s108, %s111
      %p120 = scmp.eq.s32.totalorder %s37, 1
      %p121 = por %p119, %p120
      %p122 = scmp.ne.s32.totalorder %s111, %s112
      %p123 = scmp.eq.s32.totalorder %s37, 0
      %p124 = por %p122, %p123
      %p125 = scmp.ne.s32.totalorder %s111, %s112
      %p126 = scmp.eq.s32.totalorder %s38, 1
      %p127 = por %p125, %p126
      %p129 = scmp.ne.s32.totalorder %s112, %s128
      %p130 = scmp.eq.s32.totalorder %s38, 0
      %p131 = por %p129, %p130
      %s133 = sadd.s32 %s132, 1
      %p136 = scmp.eq.s32.totalorder %s32, 1
      %p137 = scmp.ne.s32.totalorder %s132, %s134
      %p138 = scmp.eq.s32.totalorder %s32, 0
      %p139 = por %p137, %p138
      %p140 = scmp.ne.s32.totalorder %s132, %s134
      %p141 = scmp.eq.s32.totalorder %s37, 1
      %p142 = por %p140, %p141
      %p143 = scmp.ne.s32.totalorder %s134, %s135
      %p144 = scmp.eq.s32.totalorder %s37, 0
      %p145 = por %p143, %p144
      %p146 = scmp.ne.s32.totalorder %s134, %s135
      %p147 = scmp.eq.s32.totalorder %s38, 1
      %p148 = por %p146, %p147
      %p150 = scmp.ne.s32.totalorder %s135, %s149
      %p151 = scmp.eq.s32.totalorder %s38, 0
      %p152 = por %p150, %p151
      %s154 = sadd.s32 %s153, 1
      %p157 = scmp.eq.s32.totalorder %s32, 1
      %p158 = scmp.ne.s32.totalorder %s153, %s155
      %p159 = scmp.eq.s32.totalorder %s32, 0
      %p160 = por %p158, %p159
      %p161 = scmp.ne.s32.totalorder %s153, %s155
      %p162 = scmp.eq.s32.totalorder %s37, 1
      %p163 = por %p161, %p162
      %p164 = scmp.ne.s32.totalorder %s155, %s156
      %p165 = scmp.eq.s32.totalorder %s37, 0
      %p166 = por %p164, %p165
      %p167 = scmp.ne.s32.totalorder %s155, %s156
      %p168 = scmp.eq.s32.totalorder %s38, 1
      %p169 = por %p167, %p168
      %p171 = scmp.ne.s32.totalorder %s156, %s170
      %p172 = scmp.eq.s32.totalorder %s38, 0
      %p173 = por %p171, %p172
      %s175 = sadd.s32 %s174, 1
      %p178 = scmp.eq.s32.totalorder %s32, 1
      %p179 = scmp.ne.s32.totalorder %s174, %s176
      %p180 = scmp.eq.s32.totalorder %s32, 0
      %p181 = por %p179, %p180
      %p182 = scmp.ne.s32.totalorder %s174, %s176
      %p183 = scmp.eq.s32.totalorder %s37, 1
      %p184 = por %p182, %p183
      %p185 = scmp.ne.s32.totalorder %s176, %s177
      %p186 = scmp.eq.s32.totalorder %s37, 0
      %p187 = por %p185, %p186
      %p188 = scmp.ne.s32.totalorder %s176, %s177
      %p189 = scmp.eq.s32.totalorder %s38, 1
      %p190 = por %p188, %p189
      %p192 = scmp.ne.s32.totalorder %s177, %s191
      %p193 = scmp.eq.s32.totalorder %s38, 0
      %p194 = por %p192, %p193
      %s196 = sadd.s32 %s195, 1
      %p199 = scmp.eq.s32.totalorder %s32, 1
      %p200 = scmp.ne.s32.totalorder %s195, %s197
      %p201 = scmp.eq.s32.totalorder %s32, 0
      %p202 = por %p200, %p201
      %p203 = scmp.ne.s32.totalorder %s195, %s197
      %p204 = scmp.eq.s32.totalorder %s37, 1
      %p205 = por %p203, %p204
      %p206 = scmp.ne.s32.totalorder %s197, %s198
      %p207 = scmp.eq.s32.totalorder %s37, 0
      %p208 = por %p206, %p207
      %p209 = scmp.ne.s32.totalorder %s197, %s198
      %p210 = scmp.eq.s32.totalorder %s38, 1
      %p211 = por %p209, %p210
      %p213 = scmp.ne.s32.totalorder %s198, %s212
      %p214 = scmp.eq.s32.totalorder %s38, 0
      %p215 = por %p213, %p214
      %s217 = sadd.s32 %s216, 1
      %p220 = scmp.eq.s32.totalorder %s32, 1
      %p221 = scmp.ne.s32.totalorder %s216, %s218
      %p222 = scmp.eq.s32.totalorder %s32, 0
      %p223 = por %p221, %p222
      %p224 = scmp.ne.s32.totalorder %s216, %s218
      %p225 = scmp.eq.s32.totalorder %s37, 1
      %p226 = por %p224, %p225
      %p227 = scmp.ne.s32.totalorder %s218, %s219
      %p228 = scmp.eq.s32.totalorder %s37, 0
      %p229 = por %p227, %p228
      %p230 = scmp.ne.s32.totalorder %s218, %s219
      %p231 = scmp.eq.s32.totalorder %s38, 1
      %p232 = por %p230, %p231
      %p234 = scmp.ne.s32.totalorder %s219, %s233
      %p235 = scmp.eq.s32.totalorder %s38, 0
      %p236 = por %p234, %p235
      %s238 = sadd.s32 %s237, 1
      %p241 = scmp.eq.s32.totalorder %s32, 1
      %p242 = scmp.ne.s32.totalorder %s237, %s239
      %p243 = scmp.eq.s32.totalorder %s32, 0
      %p244 = por %p242, %p243
      %p245 = scmp.ne.s32.totalorder %s237, %s239
      %p246 = scmp.eq.s32.totalorder %s37, 1
      %p247 = por %p245, %p246
      %p248 = scmp.ne.s32.totalorder %s239, %s240
      %p249 = scmp.eq.s32.totalorder %s37, 0
      %p250 = por %p248, %p249
      %p251 = scmp.ne.s32.totalorder %s239, %s240
      %p252 = scmp.eq.s32.totalorder %s38, 1
      %p253 = por %p251, %p252
      %p255 = scmp.ne.s32.totalorder %s240, %s254
      %p256 = scmp.eq.s32.totalorder %s38, 0
      %p257 = por %p255, %p256
      %s259 = sadd.s32 %s258, 1
      %p262 = scmp.eq.s32.totalorder %s32, 1
      %p263 = scmp.ne.s32.totalorder %s258, %s260
      %p264 = scmp.eq.s32.totalorder %s32, 0
      %p265 = por %p263, %p264
      %p266 = scmp.ne.s32.totalorder %s258, %s260
      %p267 = scmp.eq.s32.totalorder %s37, 1
      %p268 = por %p266, %p267
      %p269 = scmp.ne.s32.totalorder %s260, %s261
      %p270 = scmp.eq.s32.totalorder %s37, 0
      %p271 = por %p269, %p270
      %p272 = scmp.ne.s32.totalorder %s260, %s261
      %p273 = scmp.eq.s32.totalorder %s38, 1
      %p274 = por %p272, %p273
      %p276 = scmp.ne.s32.totalorder %s261, %s275
      %p277 = scmp.eq.s32.totalorder %s38, 0
      %p278 = por %p276, %p277
      %s280 = sadd.s32 %s279, 1
      %p283 = scmp.eq.s32.totalorder %s32, 1
      %p284 = scmp.ne.s32.totalorder %s279, %s281
      %p285 = scmp.eq.s32.totalorder %s32, 0
      %p286 = por %p284, %p285
      %p287 = scmp.ne.s32.totalorder %s279, %s281
      %p288 = scmp.eq.s32.totalorder %s37, 1
      %p289 = por %p287, %p288
      %p290 = scmp.ne.s32.totalorder %s281, %s282
      %p291 = scmp.eq.s32.totalorder %s37, 0
      %p292 = por %p290, %p291
      %p293 = scmp.ne.s32.totalorder %s281, %s282
      %p294 = scmp.eq.s32.totalorder %s38, 1
      %p295 = por %p293, %p294
      %p297 = scmp.ne.s32.totalorder %s282, %s296
      %p298 = scmp.eq.s32.totalorder %s38, 0
      %p299 = por %p297, %p298
      %s300 = ssub.s32 %s39, %s51
      %s301 = ssub.s32 %s40, %s47
      %s302 = sor.u32 %s300, %s301
      %p303 = scmp.eq.s32.totalorder %s302, 0
      %s305 = sadd.s32 %s304, 1
      %s306 = scalar_select %p303, %s304, %s305
      %p309 = pneg %p303
      %p310 = scmp.eq.s32.totalorder %s32, 1
      %p311 = por %p309, %p310
      %p312 = scmp.ne.s32.totalorder %s304, %s307
      %p313 = scmp.eq.s32.totalorder %s32, 0
      %p314 = por %p312, %p313
      %p315 = scmp.ne.s32.totalorder %s304, %s307
      %p316 = scmp.eq.s32.totalorder %s37, 1
      %p317 = por %p315, %p316
      %p318 = scmp.ne.s32.totalorder %s307, %s308
      %p319 = scmp.eq.s32.totalorder %s37, 0
      %p320 = por %p318, %p319
      %p321 = scmp.ne.s32.totalorder %s307, %s308
      %p322 = scmp.eq.s32.totalorder %s38, 1
      %p323 = por %p321, %p322
      %p325 = scmp.ne.s32.totalorder %s308, %s324
      %p326 = scmp.eq.s32.totalorder %s38, 0
      %p327 = por %p325, %p326
      %s328 = ssub.s32 %s39, %s51
      %s329 = ssub.s32 %s40, %s47
      %s330 = sor.u32 %s328, %s329
      %p331 = scmp.eq.s32.totalorder %s330, 0
      %s333 = sadd.s32 %s332, 1
      %s334 = scalar_select %p331, %s332, %s333
      %p337 = pneg %p331
      %p338 = scmp.eq.s32.totalorder %s32, 1
      %p339 = por %p337, %p338
      %p340 = scmp.ne.s32.totalorder %s332, %s335
      %p341 = scmp.eq.s32.totalorder %s32, 0
      %p342 = por %p340, %p341
      %p343 = scmp.ne.s32.totalorder %s332, %s335
      %p344 = scmp.eq.s32.totalorder %s37, 1
      %p345 = por %p343, %p344
      %p346 = scmp.ne.s32.totalorder %s335, %s336
      %p347 = scmp.eq.s32.totalorder %s37, 0
      %p348 = por %p346, %p347
      %p349 = scmp.ne.s32.totalorder %s335, %s336
      %p350 = scmp.eq.s32.totalorder %s38, 1
      %p351 = por %p349, %p350
      %p353 = scmp.ne.s32.totalorder %s336, %s352
      %p354 = scmp.eq.s32.totalorder %s38, 0
      %p355 = por %p353, %p354
      %p356 = scmp.le.s32.totalorder 1, %s32
      %p357 = scmp.lt.s32.totalorder %s32, 3
      %p358 = pnand %p356, %p357
      %p359 = pneg %p358
      // Predicated region
      $region9: #{tpu_custom_call.1} parent=5 // pred_check
        _
      $region10: #{tpu_custom_call.1} parent=5 // pred_check_branch
        %361 = sbr.rel (%p358) target = $region12
      $region11: #{tpu_custom_call.1} parent=5 // pred_region
        %s362 = ssub.s32 %s32, 1
        // Predicated region
        $region13: #{tpu_custom_call.1} parent=11 // pred_check
          %p363 = pneg %p145
        $region14: #{tpu_custom_call.1} parent=11 // pred_check_branch
          %365 = sbr.rel (%p363) target = $region16
        $region15: #{tpu_custom_call.1} parent=11 // pred_region
          _
        $region16: #{tpu_custom_call.1} parent=11 // pred_fallthru
          _
        // Predicated region
        $region17: #{tpu_custom_call.1} parent=11 // pred_check
          %p366 = pneg %p166
        $region18: #{tpu_custom_call.1} parent=11 // pred_check_branch
          %368 = sbr.rel (%p366) target = $region20
        $region19: #{tpu_custom_call.1} parent=11 // pred_region
          _
        $region20: #{tpu_custom_call.1} parent=11 // pred_fallthru
          _
        // Predicated region
        $region21: #{tpu_custom_call.1} parent=11 // pred_check
          %p369 = pneg %p187
        $region22: #{tpu_custom_call.1} parent=11 // pred_check_branch
          %371 = sbr.rel (%p369) target = $region24
        $region23: #{tpu_custom_call.1} parent=11 // pred_region
          _
        $region24: #{tpu_custom_call.1} parent=11 // pred_fallthru
          _
        // Predicated region
        $region25: #{tpu_custom_call.1} parent=11 // pred_check
          %p372 = pneg %p208
        $region26: #{tpu_custom_call.1} parent=11 // pred_check_branch
          %374 = sbr.rel (%p372) target = $region28
        $region27: #{tpu_custom_call.1} parent=11 // pred_region
          _
        $region28: #{tpu_custom_call.1} parent=11 // pred_fallthru
          _
        // Predicated region
        $region29: #{tpu_custom_call.1} parent=11 // pred_check
          %p375 = pneg %p229
        $region30: #{tpu_custom_call.1} parent=11 // pred_check_branch
          %377 = sbr.rel (%p375) target = $region32
        $region31: #{tpu_custom_call.1} parent=11 // pred_region
          _
        $region32: #{tpu_custom_call.1} parent=11 // pred_fallthru
          _
        // Predicated region
        $region33: #{tpu_custom_call.1} parent=11 // pred_check
          %p378 = pneg %p250
        $region34: #{tpu_custom_call.1} parent=11 // pred_check_branch
          %380 = sbr.rel (%p378) target = $region36
        $region35: #{tpu_custom_call.1} parent=11 // pred_region
          %s382 = ssub.s32 16, 16
          %383 = vsyncadd [#allocation12], %s382
          %s385 = sshll.u32 [#allocation11], 4
          %s386 = int_to_ptr.vmem [resolvable:$true] %s385
          %388 = dma.hbm_to_vmem [thread:$0]  %s8, 16, %s386, [#allocation12]
        $region36: #{tpu_custom_call.1} parent=11 // pred_fallthru
          _
        // Predicated region
        $region37: #{tpu_custom_call.1} parent=11 // pred_check
          %p389 = pneg %p271
        $region38: #{tpu_custom_call.1} parent=11 // pred_check_branch
          %391 = sbr.rel (%p389) target = $region40
        $region39: #{tpu_custom_call.1} parent=11 // pred_region
          _
        $region40: #{tpu_custom_call.1} parent=11 // pred_fallthru
          _
        // Predicated region
        $region41: #{tpu_custom_call.1} parent=11 // pred_check
          %p392 = pneg %p292
        $region42: #{tpu_custom_call.1} parent=11 // pred_check_branch
          %394 = sbr.rel (%p392) target = $region44
        $region43: #{tpu_custom_call.1} parent=11 // pred_region
          _
        $region44: #{tpu_custom_call.1} parent=11 // pred_fallthru
          _
      $region12: #{tpu_custom_call.1} parent=5 // pred_fallthru
        _
      %p395 = scmp.lt.s32.totalorder %s32, 2
      // Predicated region
      $region45: #{tpu_custom_call.1} parent=5 // pred_check
        %p396 = pneg %p395
      $region46: #{tpu_custom_call.1} parent=5 // pred_check_branch
        %398 = sbr.rel (%p396) target = $region48
      $region47: #{tpu_custom_call.1} parent=5 // pred_region
        // Predicated region
        $region49: #{tpu_custom_call.1} parent=47 // pred_check
          %p399 = pneg %p66
        $region50: #{tpu_custom_call.1} parent=47 // pred_check_branch
          %401 = sbr.rel (%p399) target = $region52
        $region51: #{tpu_custom_call.1} parent=47 // pred_region
          %s402 = sand.u32 %s56, 1
          %s403 = scalar_lea.sflag [#allocation6], %s402
          %s404 = sand.u32 %s56, 1
          %s405 = smul.addr %s404, 8
          %s406 = scalar_lea.vmem [#allocation5], %s405
          %s408 = ssub.s32 128, 128
          %409 = vsyncadd %s403, %s408
          %s410 = sadd.s32 %s40, %s39
          %s411 = smul.addr %s410, 128
          %s412 = scalar_lea.hbm %s0, %s411
          %s414 = sshll.u32 %s406, 4
          %s415 = int_to_ptr.vmem [resolvable:$true] %s414
          %417 = dma.hbm_to_vmem [thread:$0]  %s412, 128, %s415, %s403
        $region52: #{tpu_custom_call.1} parent=47 // pred_fallthru
          _
        // Predicated region
        $region53: #{tpu_custom_call.1} parent=47 // pred_check
          %p418 = pneg %p92
        $region54: #{tpu_custom_call.1} parent=47 // pred_check_branch
          %420 = sbr.rel (%p418) target = $region56
        $region55: #{tpu_custom_call.1} parent=47 // pred_region
          %s421 = sand.u32 %s32, 1
          %s422 = scalar_lea.sflag [#allocation9], %s421
          %s423 = sand.u32 %s82, 1
          %s424 = smul.addr %s423, 8
          %s425 = scalar_lea.vmem [#allocation8], %s424
          %s427 = ssub.s32 128, 128
          %428 = vsyncadd %s422, %s427
          %s429 = smul.addr %s39, 128
          %s430 = scalar_lea.hbm %s1, %s429
          %s432 = sshll.u32 %s425, 4
          %s433 = int_to_ptr.vmem [resolvable:$true] %s432
          %435 = dma.hbm_to_vmem [thread:$0]  %s430, 128, %s433, %s422
        $region56: #{tpu_custom_call.1} parent=47 // pred_fallthru
          _
        // Predicated region
        $region57: #{tpu_custom_call.1} parent=47 // pred_check
          %p436 = pneg %p118
        $region58: #{tpu_custom_call.1} parent=47 // pred_check_branch
          %438 = sbr.rel (%p436) target = $region60
        $region59: #{tpu_custom_call.1} parent=47 // pred_region
          %s439 = sand.u32 %s32, 1
          %s440 = scalar_lea.sflag [#allocation9], %s439
          %s441 = sand.u32 %s108, 1
          %s442 = smul.addr %s441, 8
          %s443 = scalar_lea.vmem [#allocation10], %s442
          %s445 = ssub.s32 128, 128
          %446 = vsyncadd %s440, %s445
          %s447 = smul.addr %s39, 128
          %s448 = scalar_lea.hbm %s2, %s447
          %s450 = sshll.u32 %s443, 4
          %s451 = int_to_ptr.vmem [resolvable:$true] %s450
          %453 = dma.hbm_to_vmem [thread:$0]  %s448, 128, %s451, %s440
        $region60: #{tpu_custom_call.1} parent=47 // pred_fallthru
          _
      $region48: #{tpu_custom_call.1} parent=5 // pred_fallthru
        _
      %p454 = scmp.le.s32.totalorder 1, %s32
      %p455 = scmp.lt.s32.totalorder %s32, 3
      %p456 = pnand %p454, %p455
      %p457 = pneg %p456
      // Predicated region
      $region61: #{tpu_custom_call.1} parent=5 // pred_check
        _
      $region62: #{tpu_custom_call.1} parent=5 // pred_check_branch
        %459 = sbr.rel (%p456) target = $region64
      $region63: #{tpu_custom_call.1} parent=5 // pred_region
        %s460 = ssub.s32 %s32, 1
        %s461 = sand.u32 %s59, 1
        %s462 = scalar_lea.sflag [#allocation6], %s461
        %s463 = sand.u32 %s59, 1
        %s464 = smul.addr %s463, 8
        %s465 = scalar_lea.vmem [#allocation5], %s464
        // Predicated region
        $region65: #{tpu_custom_call.1} parent=63 // pred_check
          %p466 = pneg %p72
        $region66: #{tpu_custom_call.1} parent=63 // pred_check_branch
          %468 = sbr.rel (%p466) target = $region68
        $region67: #{tpu_custom_call.1} parent=63 // pred_region
          %469 = dma.done %s462, 128
        $region68: #{tpu_custom_call.1} parent=63 // pred_fallthru
          _
        %s470 = sand.u32 %s37, 1
        %s471 = scalar_lea.sflag [#allocation9], %s470
        %s472 = sand.u32 %s85, 1
        %s473 = smul.addr %s472, 8
        %s474 = scalar_lea.vmem [#allocation8], %s473
        // Predicated region
        $region69: #{tpu_custom_call.1} parent=63 // pred_check
          %p475 = pneg %p98
        $region70: #{tpu_custom_call.1} parent=63 // pred_check_branch
          %477 = sbr.rel (%p475) target = $region72
        $region71: #{tpu_custom_call.1} parent=63 // pred_region
          %478 = dma.done %s471, 128
        $region72: #{tpu_custom_call.1} parent=63 // pred_fallthru
          _
        %s479 = sand.u32 %s37, 1
        %s480 = scalar_lea.sflag [#allocation9], %s479
        %s481 = sand.u32 %s111, 1
        %s482 = smul.addr %s481, 8
        %s483 = scalar_lea.vmem [#allocation10], %s482
        // Predicated region
        $region73: #{tpu_custom_call.1} parent=63 // pred_check
          %p484 = pneg %p124
        $region74: #{tpu_custom_call.1} parent=63 // pred_check_branch
          %486 = sbr.rel (%p484) target = $region76
        $region75: #{tpu_custom_call.1} parent=63 // pred_region
          %487 = dma.done %s480, 128
        $region76: #{tpu_custom_call.1} parent=63 // pred_fallthru
          _
        // Predicated region
        $region77: #{tpu_custom_call.1} parent=63 // pred_check
          %p488 = pneg %p250
        $region78: #{tpu_custom_call.1} parent=63 // pred_check_branch
          %490 = sbr.rel (%p488) target = $region80
        $region79: #{tpu_custom_call.1} parent=63 // pred_region
          %491 = dma.done [#allocation12], 16
        $region80: #{tpu_custom_call.1} parent=63 // pred_fallthru
          _
        %s492 = sand.u32 %s59, 1
        %s493 = scalar_lea.sflag [#allocation6], %s492
        %s494 = sand.u32 %s59, 1
        %s495 = smul.addr %s494, 8
        %s496 = scalar_lea.vmem [#allocation5], %s495
        %p497 = pneg %p72
        %p498 = pneg %p69
        %s499 = sand.u32 %s37, 1
        %s500 = scalar_lea.sflag [#allocation9], %s499
        %s501 = sand.u32 %s85, 1
        %s502 = smul.addr %s501, 8
        %s503 = scalar_lea.vmem [#allocation8], %s502
        %p504 = pneg %p98
        %p505 = pneg %p95
        %s506 = sand.u32 %s37, 1
        %s507 = scalar_lea.sflag [#allocation9], %s506
        %s508 = sand.u32 %s111, 1
        %s509 = smul.addr %s508, 8
        %s510 = scalar_lea.vmem [#allocation10], %s509
        %p511 = pneg %p124
        %p512 = pneg %p121
        %p513 = pneg %p145
        %p514 = pneg %p142
        %p515 = pneg %p166
        %p516 = pneg %p163
        %p517 = pneg %p187
        %p518 = pneg %p184
        %p519 = pneg %p208
        %p520 = pneg %p205
        %p521 = pneg %p229
        %p522 = pneg %p226
        %p523 = pneg %p250
        %p524 = pneg %p247
        %p525 = pneg %p271
        %p526 = pneg %p268
        %p527 = pneg %p292
        %p528 = pneg %p289
        %p529 = pneg %p320
        %p530 = pneg %p317
        %s531 = sand.u32 %s307, 1
        %s532 = scalar_lea.sflag [#allocation7], %s531
        %s533 = sand.u32 %s307, 1
        %s534 = smul.addr %s533, 8
        %s535 = scalar_lea.vmem [#allocation13], %s534
        %p536 = pneg %p348
        %p537 = pneg %p345
        %s538 = sand.u32 %s335, 1
        %s539 = scalar_lea.sflag [#allocation15], %s538
        %s540 = sand.u32 %s335, 1
        %s541 = smul.addr %s540, 32
        %s542 = scalar_lea.vmem [#allocation14], %s541
        %p543 = scmp.eq.s32.totalorder %s42, 0
        // Predicated region
        $region81: #{tpu_custom_call.1} parent=63 // pred_check
          %p544 = pneg %p543
        $region82: #{tpu_custom_call.1} parent=63 // pred_check_branch
          %546 = sbr.rel (%p544) target = $region84
        $region83: #{tpu_custom_call.1} parent=63 // pred_region
          %v547 = vld [vmem:[%s474] sm:$0xff]
          %v548 = vld [vmem:[%s483] sm:$0xff]
          %v549 = vld [vmem:[%s5] sm:$0xff]
          %v550 = vld [vmem:[%s5 + $0x8] sm:$0xff]
          %v551 = vld [vmem:[%s5 + $0x10] sm:$0xff]
          %v552 = vld [vmem:[%s5 + $0x18] sm:$0xff]
          %v553 = vld [vmem:[%s6] sm:$0x1]
          %v555 = vlaneseq
          %v556 = vshrl.u32 %v555, 7
          %v557 = vsub.s32 0, %v556
          %v558 = vrot.slane %v553, %v557
          %vm560 = vcmask 261120
          %v562 = vsel %vm560, %v547, 0
          %564 = vmatprep.subr.mxu0 0.0
          %565 = vmatpush1.msra.mxu0 %v549
          %566 = vmatprep.subr.mxu0 0.0
          %567 = vmatpush1.msra.mxu0 %v550
          %568 = vmatprep.subr.mxu0 0.0
          %569 = vmatpush1.msra.mxu0 %v551
          %570 = vmatprep.subr.mxu0 0.0
          %571 = vmatpush1.msra.mxu0 %v552
          %572 = vmatprep.subr.mxu0 0.0
          %573 = vmatpush1.msra.mxu0 0.0
          %574 = vmatprep.subr.mxu0 0.0
          %575 = vmatpush1.msra.mxu0 0.0
          %576 = vmatprep.subr.mxu0 0.0
          %577 = vmatpush1.msra.mxu0 0.0
          %578 = vmatprep.subr.mxu0 0.0
          %579 = vmatpush1.msra.mxu0 0.0
          %580 = vmatprep.subr.mxu0 0.0
          %581 = vmatpush1.msra.mxu0 0.0
          %582 = vmatprep.subr.mxu0 0.0
          %583 = vmatpush1.msra.mxu0 0.0
          %584 = vmatprep.subr.mxu0 0.0
          %585 = vmatpush1.msra.mxu0 0.0
          %586 = vmatprep.subr.mxu0 0.0
          %587 = vmatpush1.msra.mxu0 0.0
          %588 = vmatprep.subr.mxu0 0.0
          %589 = vmatpush1.msra.mxu0 0.0
          %590 = vmatprep.subr.mxu0 0.0
          %591 = vmatpush1.msra.mxu0 0.0
          %592 = vmatprep.subr.mxu0 0.0
          %593 = vmatpush1.msra.mxu0 0.0
          %594 = vmatprep.subr.mxu0 0.0
          %595 = vmatpush1.msra.mxu0 0.0
          %596 = vmatprep.subr.mxu0 0.0
          %597 = vmatpush1.msra.mxu0 0.0
          %598 = vmatprep.subr.mxu0 0.0
          %599 = vmatpush1.msra.mxu0 0.0
          %600 = vmatprep.subr.mxu0 0.0
          %601 = vmatpush1.msra.mxu0 0.0
          %602 = vmatprep.subr.mxu0 0.0
          %603 = vmatpush1.msra.mxu0 0.0
          %604 = vmatprep.subr.mxu0 0.0
          %605 = vmatpush1.msra.mxu0 0.0
          %606 = vmatprep.subr.mxu0 0.0
          %607 = vmatpush1.msra.mxu0 0.0
          %608 = vmatprep.subr.mxu0 0.0
          %609 = vmatpush1.msra.mxu0 0.0
          %610 = vmatprep.subr.mxu0 0.0
          %611 = vmatpush1.msra.mxu0 0.0
          %612 = vmatprep.subr.mxu0 0.0
          %613 = vmatpush1.msra.mxu0 0.0
          %614 = vmatprep.subr.mxu0 0.0
          %615 = vmatpush1.msra.mxu0 0.0
          %616 = vmatprep.subr.mxu0 0.0
          %617 = vmatpush1.msra.mxu0 0.0
          %618 = vmatprep.subr.mxu0 0.0
          %619 = vmatpush1.msra.mxu0 0.0
          %620 = vmatprep.subr.mxu0 0.0
          %621 = vmatpush1.msra.mxu0 0.0
          %622 = vmatprep.subr.mxu0 0.0
          %623 = vmatpush1.msra.mxu0 0.0
          %624 = vmatprep.subr.mxu0 0.0
          %625 = vmatpush1.msra.mxu0 0.0
          %626 = vmatprep.subr.mxu0 0.0
          %627 = vmatpush1.msra.mxu0 0.0
          %628 = vmatprep.mubr.f32.mxu0 0.0
          %629 = vmatmul.mubr.f32.gmra.mrb[0].mxu0 %v562
          %v630 = vpop.f32.mrb[0].mxu0
          %v631 = vadd.f32 %v558, %v630
          %v632 = vpop.f32.mrb[0].mxu0
          %633 = vdwg.mxu0
          %v634 = vld [vmem:[%s7] sm:$0xff]
          %v635 = vld [vmem:[%s7 + $0x8] sm:$0xff]
          %v636 = vld [vmem:[%s7 + $0x10] sm:$0xff]
          %v637 = vld [vmem:[%s7 + $0x18] sm:$0xff]
          %v638 = vld [vmem:[#allocation11] sm:$0x1]
          %v640 = vlaneseq
          %v641 = vshrl.u32 %v640, 7
          %v642 = vsub.s32 0, %v641
          %v643 = vrot.slane %v638, %v642
          %v646 = vsel %vm560, %v548, 0
          %648 = vmatprep.subr.mxu0 0.0
          %649 = vmatpush1.msra.mxu0 %v634
          %650 = vmatprep.subr.mxu0 0.0
          %651 = vmatpush1.msra.mxu0 %v635
          %652 = vmatprep.subr.mxu0 0.0
          %653 = vmatpush1.msra.mxu0 %v636
          %654 = vmatprep.subr.mxu0 0.0
          %655 = vmatpush1.msra.mxu0 %v637
          %656 = vmatprep.subr.mxu0 0.0
          %657 = vmatpush1.msra.mxu0 0.0
          %658 = vmatprep.subr.mxu0 0.0
          %659 = vmatpush1.msra.mxu0 0.0
          %660 = vmatprep.subr.mxu0 0.0
          %661 = vmatpush1.msra.mxu0 0.0
          %662 = vmatprep.subr.mxu0 0.0
          %663 = vmatpush1.msra.mxu0 0.0
          %664 = vmatprep.subr.mxu0 0.0
          %665 = vmatpush1.msra.mxu0 0.0
          %666 = vmatprep.subr.mxu0 0.0
          %667 = vmatpush1.msra.mxu0 0.0
          %668 = vmatprep.subr.mxu0 0.0
          %669 = vmatpush1.msra.mxu0 0.0
          %670 = vmatprep.subr.mxu0 0.0
          %671 = vmatpush1.msra.mxu0 0.0
          %672 = vmatprep.subr.mxu0 0.0
          %673 = vmatpush1.msra.mxu0 0.0
          %674 = vmatprep.subr.mxu0 0.0
          %675 = vmatpush1.msra.mxu0 0.0
          %676 = vmatprep.subr.mxu0 0.0
          %677 = vmatpush1.msra.mxu0 0.0
          %678 = vmatprep.subr.mxu0 0.0
          %679 = vmatpush1.msra.mxu0 0.0
          %680 = vmatprep.subr.mxu0 0.0
          %681 = vmatpush1.msra.mxu0 0.0
          %682 = vmatprep.subr.mxu0 0.0
          %683 = vmatpush1.msra.mxu0 0.0
          %684 = vmatprep.subr.mxu0 0.0
          %685 = vmatpush1.msra.mxu0 0.0
          %686 = vmatprep.subr.mxu0 0.0
          %687 = vmatpush1.msra.mxu0 0.0
          %688 = vmatprep.subr.mxu0 0.0
          %689 = vmatpush1.msra.mxu0 0.0
          %690 = vmatprep.subr.mxu0 0.0
          %691 = vmatpush1.msra.mxu0 0.0
          %692 = vmatprep.subr.mxu0 0.0
          %693 = vmatpush1.msra.mxu0 0.0
          %694 = vmatprep.subr.mxu0 0.0
          %695 = vmatpush1.msra.mxu0 0.0
          %696 = vmatprep.subr.mxu0 0.0
          %697 = vmatpush1.msra.mxu0 0.0
          %698 = vmatprep.subr.mxu0 0.0
          %699 = vmatpush1.msra.mxu0 0.0
          %700 = vmatprep.subr.mxu0 0.0
          %701 = vmatpush1.msra.mxu0 0.0
          %702 = vmatprep.subr.mxu0 0.0
          %703 = vmatpush1.msra.mxu0 0.0
          %704 = vmatprep.subr.mxu0 0.0
          %705 = vmatpush1.msra.mxu0 0.0
          %706 = vmatprep.subr.mxu0 0.0
          %707 = vmatpush1.msra.mxu0 0.0
          %708 = vmatprep.subr.mxu0 0.0
          %709 = vmatpush1.msra.mxu0 0.0
          %710 = vmatprep.subr.mxu0 0.0
          %711 = vmatpush1.msra.mxu0 0.0
          %712 = vmatprep.mubr.f32.mxu0 0.0
          %713 = vmatmul.mubr.f32.gmra.mrb[0].mxu0 %v646
          %v714 = vpop.f32.mrb[0].mxu0
          %v715 = vadd.f32 %v643, %v714
          %v716 = vpop.f32.mrb[0].mxu0
          %717 = vdwg.mxu0
          %vm718 = vcmask 523264
          %719 = vst.msk [vmem:[#allocation2] sm:$0xff] %vm718, %v631
          %720 = vst.msk [vmem:[#allocation3] sm:$0xff] %vm718, %v715
        $region84: #{tpu_custom_call.1} parent=63 // pred_fallthru
          _
        %v721 = vld [vmem:[%s465] sm:$0xff]
        %v722 = vld [vmem:[%s3] sm:$0xff]
        %v723 = vld [vmem:[%s3 + $0x8] sm:$0xff]
        %v724 = vld [vmem:[%s3 + $0x10] sm:$0xff]
        %v725 = vld [vmem:[%s3 + $0x18] sm:$0xff]
        %v726 = vld [vmem:[%s4] sm:$0x1]
        %v728 = vlaneseq
        %v729 = vshrl.u32 %v728, 7
        %v730 = vsub.s32 0, %v729
        %v731 = vrot.slane %v726, %v730
        %vm733 = vcmask 261120
        %v735 = vsel %vm733, %v721, 0
        %737 = vmatprep.subr.mxu0 0.0
        %738 = vmatpush1.msra.mxu0 %v722
        %739 = vmatprep.subr.mxu0 0.0
        %740 = vmatpush1.msra.mxu0 %v723
        %741 = vmatprep.subr.mxu0 0.0
        %742 = vmatpush1.msra.mxu0 %v724
        %743 = vmatprep.subr.mxu0 0.0
        %744 = vmatpush1.msra.mxu0 %v725
        %745 = vmatprep.subr.mxu0 0.0
        %746 = vmatpush1.msra.mxu0 0.0
        %747 = vmatprep.subr.mxu0 0.0
        %748 = vmatpush1.msra.mxu0 0.0
        %749 = vmatprep.subr.mxu0 0.0
        %750 = vmatpush1.msra.mxu0 0.0
        %751 = vmatprep.subr.mxu0 0.0
        %752 = vmatpush1.msra.mxu0 0.0
        %753 = vmatprep.subr.mxu0 0.0
        %754 = vmatpush1.msra.mxu0 0.0
        %755 = vmatprep.subr.mxu0 0.0
        %756 = vmatpush1.msra.mxu0 0.0
        %757 = vmatprep.subr.mxu0 0.0
        %758 = vmatpush1.msra.mxu0 0.0
        %759 = vmatprep.subr.mxu0 0.0
        %760 = vmatpush1.msra.mxu0 0.0
        %761 = vmatprep.subr.mxu0 0.0
        %762 = vmatpush1.msra.mxu0 0.0
        %763 = vmatprep.subr.mxu0 0.0
        %764 = vmatpush1.msra.mxu0 0.0
        %765 = vmatprep.subr.mxu0 0.0
        %766 = vmatpush1.msra.mxu0 0.0
        %767 = vmatprep.subr.mxu0 0.0
        %768 = vmatpush1.msra.mxu0 0.0
        %769 = vmatprep.subr.mxu0 0.0
        %770 = vmatpush1.msra.mxu0 0.0
        %771 = vmatprep.subr.mxu0 0.0
        %772 = vmatpush1.msra.mxu0 0.0
        %773 = vmatprep.subr.mxu0 0.0
        %774 = vmatpush1.msra.mxu0 0.0
        %775 = vmatprep.subr.mxu0 0.0
        %776 = vmatpush1.msra.mxu0 0.0
        %777 = vmatprep.subr.mxu0 0.0
        %778 = vmatpush1.msra.mxu0 0.0
        %779 = vmatprep.subr.mxu0 0.0
        %780 = vmatpush1.msra.mxu0 0.0
        %781 = vmatprep.subr.mxu0 0.0
        %782 = vmatpush1.msra.mxu0 0.0
        %783 = vmatprep.subr.mxu0 0.0
        %784 = vmatpush1.msra.mxu0 0.0
        %785 = vmatprep.subr.mxu0 0.0
        %786 = vmatpush1.msra.mxu0 0.0
        %787 = vmatprep.subr.mxu0 0.0
        %788 = vmatpush1.msra.mxu0 0.0
        %789 = vmatprep.subr.mxu0 0.0
        %790 = vmatpush1.msra.mxu0 0.0
        %791 = vmatprep.subr.mxu0 0.0
        %792 = vmatpush1.msra.mxu0 0.0
        %793 = vmatprep.subr.mxu0 0.0
        %794 = vmatpush1.msra.mxu0 0.0
        %795 = vmatprep.subr.mxu0 0.0
        %796 = vmatpush1.msra.mxu0 0.0
        %797 = vmatprep.subr.mxu0 0.0
        %798 = vmatpush1.msra.mxu0 0.0
        %799 = vmatprep.subr.mxu0 0.0
        %800 = vmatpush1.msra.mxu0 0.0
        %801 = vmatprep.mubr.f32.mxu0 0.0
        %802 = vmatmul.mubr.f32.gmra.mrb[0].mxu0 %v735
        %v803 = vpop.f32.mrb[0].mxu0
        %v804 = vadd.f32 %v731, %v803
        %v805 = vpop.f32.mrb[0].mxu0
        %806 = vdwg.mxu0
        %v807 = vld [vmem:[#allocation2] sm:$0xff]
        %v808 = vld [vmem:[#allocation3] sm:$0xff]
        %vm809 = vcmask 130048
        %v811 = vsel %vm809, %v804, 0
        %v814 = vsel %vm809, %v807, 0
        %816 = vmatprep.subr.mxu0 0.0
        %817 = vmatpush1.xpose.msra.mxu0 %v814
        %818 = vmatprep.subr.mxu0 0.0
        %819 = vmatpush1.xpose.msra.mxu0 0.0
        %820 = vmatprep.subr.mxu0 0.0
        %821 = vmatpush1.xpose.msra.mxu0 0.0
        %822 = vmatprep.subr.mxu0 0.0
        %823 = vmatpush1.xpose.msra.mxu0 0.0
        %824 = vmatprep.subr.mxu0 0.0
        %825 = vmatpush1.xpose.msra.mxu0 0.0
        %826 = vmatprep.subr.mxu0 0.0
        %827 = vmatpush1.xpose.msra.mxu0 0.0
        %828 = vmatprep.subr.mxu0 0.0
        %829 = vmatpush1.xpose.msra.mxu0 0.0
        %830 = vmatprep.subr.mxu0 0.0
        %831 = vmatpush1.xpose.msra.mxu0 0.0
        %832 = vmatprep.subr.mxu0 0.0
        %833 = vmatpush1.xpose.msra.mxu0 0.0
        %834 = vmatprep.subr.mxu0 0.0
        %835 = vmatpush1.xpose.msra.mxu0 0.0
        %836 = vmatprep.subr.mxu0 0.0
        %837 = vmatpush1.xpose.msra.mxu0 0.0
        %838 = vmatprep.subr.mxu0 0.0
        %839 = vmatpush1.xpose.msra.mxu0 0.0
        %840 = vmatprep.subr.mxu0 0.0
        %841 = vmatpush1.xpose.msra.mxu0 0.0
        %842 = vmatprep.subr.mxu0 0.0
        %843 = vmatpush1.xpose.msra.mxu0 0.0
        %844 = vmatprep.subr.mxu0 0.0
        %845 = vmatpush1.xpose.msra.mxu0 0.0
        %846 = vmatprep.subr.mxu0 0.0
        %847 = vmatpush1.xpose.msra.mxu0 0.0
        %848 = vmatprep.subr.mxu0 0.0
        %849 = vmatpush1.xpose.msra.mxu0 0.0
        %850 = vmatprep.subr.mxu0 0.0
        %851 = vmatpush1.xpose.msra.mxu0 0.0
        %852 = vmatprep.subr.mxu0 0.0
        %853 = vmatpush1.xpose.msra.mxu0 0.0
        %854 = vmatprep.subr.mxu0 0.0
        %855 = vmatpush1.xpose.msra.mxu0 0.0
        %856 = vmatprep.subr.mxu0 0.0
        %857 = vmatpush1.xpose.msra.mxu0 0.0
        %858 = vmatprep.subr.mxu0 0.0
        %859 = vmatpush1.xpose.msra.mxu0 0.0
        %860 = vmatprep.subr.mxu0 0.0
        %861 = vmatpush1.xpose.msra.mxu0 0.0
        %862 = vmatprep.subr.mxu0 0.0
        %863 = vmatpush1.xpose.msra.mxu0 0.0
        %864 = vmatprep.subr.mxu0 0.0
        %865 = vmatpush1.xpose.msra.mxu0 0.0
        %866 = vmatprep.subr.mxu0 0.0
        %867 = vmatpush1.xpose.msra.mxu0 0.0
        %868 = vmatprep.subr.mxu0 0.0
        %869 = vmatpush1.xpose.msra.mxu0 0.0
        %870 = vmatprep.subr.mxu0 0.0
        %871 = vmatpush1.xpose.msra.mxu0 0.0
        %872 = vmatprep.subr.mxu0 0.0
        %873 = vmatpush1.xpose.msra.mxu0 0.0
        %874 = vmatprep.subr.mxu0 0.0
        %875 = vmatpush1.xpose.msra.mxu0 0.0
        %876 = vmatprep.subr.mxu0 0.0
        %877 = vmatpush1.xpose.msra.mxu0 0.0
        %878 = vmatprep.subr.mxu0 0.0
        %879 = vmatpush1.xpose.msra.mxu0 0.0
        %880 = vmatprep.mubr.f32.mxu0 0.0
        %881 = vmatmul.mubr.f32.gmra.mrb[0].mxu0 %v811
        %v882 = vpop.f32.mrb[0].mxu0
        %v883 = vadd.f32 0.0, %v882
        %v884 = vpop.f32.mrb[0].mxu0
        %885 = vdwg.mxu0
        %vm886 = vcmask 64512
        %v887 = vsel %vm886, %v883, -inf
        %888 = vmax.xlane.f32.xlu0 %v887
        %v889 = vpop.xlane.xlu0 %888
        %v890 = vsub.f32 %v883, %v889
        %v891 = vmul.f32 %v890, 1.442695
        %v892 = vpow.pop %v891
        %v893 = vsel %vm886, %v892, 0.0
        %894 = vadd.xlane.f32.xlu0 %v893
        %v895 = vpop.xlane.xlu0 %894
        %v896 = vrcp.pop %v895
        %v897 = vmul.f32 %v892, %v896
        %898 = vst.msk [vmem:[%s542] sm:$0xff] %vm886, %v897
        %v900 = vsel %vm886, %v897, 0
        %902 = vmatprep.subr.mxu0 0.0
        %903 = vmatpush1.msra.mxu0 %v808
        %904 = vmatprep.subr.mxu0 0.0
        %905 = vmatpush1.msra.mxu0 0.0
        %906 = vmatprep.subr.mxu0 0.0
        %907 = vmatpush1.msra.mxu0 0.0
        %908 = vmatprep.subr.mxu0 0.0
        %909 = vmatpush1.msra.mxu0 0.0
        %910 = vmatprep.subr.mxu0 0.0
        %911 = vmatpush1.msra.mxu0 0.0
        %912 = vmatprep.subr.mxu0 0.0
        %913 = vmatpush1.msra.mxu0 0.0
        %914 = vmatprep.subr.mxu0 0.0
        %915 = vmatpush1.msra.mxu0 0.0
        %916 = vmatprep.subr.mxu0 0.0
        %917 = vmatpush1.msra.mxu0 0.0
        %918 = vmatprep.subr.mxu0 0.0
        %919 = vmatpush1.msra.mxu0 0.0
        %920 = vmatprep.subr.mxu0 0.0
        %921 = vmatpush1.msra.mxu0 0.0
        %922 = vmatprep.subr.mxu0 0.0
        %923 = vmatpush1.msra.mxu0 0.0
        %924 = vmatprep.subr.mxu0 0.0
        %925 = vmatpush1.msra.mxu0 0.0
        %926 = vmatprep.subr.mxu0 0.0
        %927 = vmatpush1.msra.mxu0 0.0
        %928 = vmatprep.subr.mxu0 0.0
        %929 = vmatpush1.msra.mxu0 0.0
        %930 = vmatprep.subr.mxu0 0.0
        %931 = vmatpush1.msra.mxu0 0.0
        %932 = vmatprep.subr.mxu0 0.0
        %933 = vmatpush1.msra.mxu0 0.0
        %934 = vmatprep.subr.mxu0 0.0
        %935 = vmatpush1.msra.mxu0 0.0
        %936 = vmatprep.subr.mxu0 0.0
        %937 = vmatpush1.msra.mxu0 0.0
        %938 = vmatprep.subr.mxu0 0.0
        %939 = vmatpush1.msra.mxu0 0.0
        %940 = vmatprep.subr.mxu0 0.0
        %941 = vmatpush1.msra.mxu0 0.0
        %942 = vmatprep.subr.mxu0 0.0
        %943 = vmatpush1.msra.mxu0 0.0
        %944 = vmatprep.subr.mxu0 0.0
        %945 = vmatpush1.msra.mxu0 0.0
        %946 = vmatprep.subr.mxu0 0.0
        %947 = vmatpush1.msra.mxu0 0.0
        %948 = vmatprep.subr.mxu0 0.0
        %949 = vmatpush1.msra.mxu0 0.0
        %950 = vmatprep.subr.mxu0 0.0
        %951 = vmatpush1.msra.mxu0 0.0
        %952 = vmatprep.subr.mxu0 0.0
        %953 = vmatpush1.msra.mxu0 0.0
        %954 = vmatprep.subr.mxu0 0.0
        %955 = vmatpush1.msra.mxu0 0.0
        %956 = vmatprep.subr.mxu0 0.0
        %957 = vmatpush1.msra.mxu0 0.0
        %958 = vmatprep.subr.mxu0 0.0
        %959 = vmatpush1.msra.mxu0 0.0
        %960 = vmatprep.subr.mxu0 0.0
        %961 = vmatpush1.msra.mxu0 0.0
        %962 = vmatprep.subr.mxu0 0.0
        %963 = vmatpush1.msra.mxu0 0.0
        %964 = vmatprep.subr.mxu0 0.0
        %965 = vmatpush1.msra.mxu0 0.0
        %966 = vmatprep.mubr.f32.mxu0 0.0
        %967 = vmatmul.mubr.f32.gmra.mrb[0].mxu0 %v900
        %v968 = vpop.f32.mrb[0].mxu0
        %v969 = vadd.f32 0.0, %v968
        %v970 = vpop.f32.mrb[0].mxu0
        %971 = vdwg.mxu0
        %972 = vst.msk [vmem:[#allocation4] sm:$0xff] %vm809, %v969
        %v973 = vld [vmem:[#allocation2] sm:$0xff]
        %v974 = vld [vmem:[#allocation3] sm:$0xff]
        %975 = vrot.lane.b32.xlu0 %v804, 112
        %v976 = vpop.permute.xlu0 %975
        %978 = vrot.lane.b32.xlu0 %v973, 112
        %v979 = vpop.permute.xlu0 %978
        %v980 = vsel %vm809, %v976, 0
        %v982 = vsel %vm809, %v979, 0
        %984 = vmatprep.subr.mxu0 0.0
        %985 = vmatpush1.xpose.msra.mxu0 %v982
        %986 = vmatprep.subr.mxu0 0.0
        %987 = vmatpush1.xpose.msra.mxu0 0.0
        %988 = vmatprep.subr.mxu0 0.0
        %989 = vmatpush1.xpose.msra.mxu0 0.0
        %990 = vmatprep.subr.mxu0 0.0
        %991 = vmatpush1.xpose.msra.mxu0 0.0
        %992 = vmatprep.subr.mxu0 0.0
        %993 = vmatpush1.xpose.msra.mxu0 0.0
        %994 = vmatprep.subr.mxu0 0.0
        %995 = vmatpush1.xpose.msra.mxu0 0.0
        %996 = vmatprep.subr.mxu0 0.0
        %997 = vmatpush1.xpose.msra.mxu0 0.0
        %998 = vmatprep.subr.mxu0 0.0
        %999 = vmatpush1.xpose.msra.mxu0 0.0
        %1000 = vmatprep.subr.mxu0 0.0
        %1001 = vmatpush1.xpose.msra.mxu0 0.0
        %1002 = vmatprep.subr.mxu0 0.0
        %1003 = vmatpush1.xpose.msra.mxu0 0.0
        %1004 = vmatprep.subr.mxu0 0.0
        %1005 = vmatpush1.xpose.msra.mxu0 0.0
        %1006 = vmatprep.subr.mxu0 0.0
        %1007 = vmatpush1.xpose.msra.mxu0 0.0
        %1008 = vmatprep.subr.mxu0 0.0
        %1009 = vmatpush1.xpose.msra.mxu0 0.0
        %1010 = vmatprep.subr.mxu0 0.0
        %1011 = vmatpush1.xpose.msra.mxu0 0.0
        %1012 = vmatprep.subr.mxu0 0.0
        %1013 = vmatpush1.xpose.msra.mxu0 0.0
        %1014 = vmatprep.subr.mxu0 0.0
        %1015 = vmatpush1.xpose.msra.mxu0 0.0
        %1016 = vmatprep.subr.mxu0 0.0
        %1017 = vmatpush1.xpose.msra.mxu0 0.0
        %1018 = vmatprep.subr.mxu0 0.0
        %1019 = vmatpush1.xpose.msra.mxu0 0.0
        %1020 = vmatprep.subr.mxu0 0.0
        %1021 = vmatpush1.xpose.msra.mxu0 0.0
        %1022 = vmatprep.subr.mxu0 0.0
        %1023 = vmatpush1.xpose.msra.mxu0 0.0
        %1024 = vmatprep.subr.mxu0 0.0
        %1025 = vmatpush1.xpose.msra.mxu0 0.0
        %1026 = vmatprep.subr.mxu0 0.0
        %1027 = vmatpush1.xpose.msra.mxu0 0.0
        %1028 = vmatprep.subr.mxu0 0.0
        %1029 = vmatpush1.xpose.msra.mxu0 0.0
        %1030 = vmatprep.subr.mxu0 0.0
        %1031 = vmatpush1.xpose.msra.mxu0 0.0
        %1032 = vmatprep.subr.mxu0 0.0
        %1033 = vmatpush1.xpose.msra.mxu0 0.0
        %1034 = vmatprep.subr.mxu0 0.0
        %1035 = vmatpush1.xpose.msra.mxu0 0.0
        %1036 = vmatprep.subr.mxu0 0.0
        %1037 = vmatpush1.xpose.msra.mxu0 0.0
        %1038 = vmatprep.subr.mxu0 0.0
        %1039 = vmatpush1.xpose.msra.mxu0 0.0
        %1040 = vmatprep.subr.mxu0 0.0
        %1041 = vmatpush1.xpose.msra.mxu0 0.0
        %1042 = vmatprep.subr.mxu0 0.0
        %1043 = vmatpush1.xpose.msra.mxu0 0.0
        %1044 = vmatprep.subr.mxu0 0.0
        %1045 = vmatpush1.xpose.msra.mxu0 0.0
        %1046 = vmatprep.subr.mxu0 0.0
        %1047 = vmatpush1.xpose.msra.mxu0 0.0
        %1048 = vmatprep.mubr.f32.mxu0 0.0
        %1049 = vmatmul.mubr.f32.gmra.mrb[0].mxu0 %v980
        %v1050 = vpop.f32.mrb[0].mxu0
        %v1051 = vadd.f32 0.0, %v1050
        %v1052 = vpop.f32.mrb[0].mxu0
        %1053 = vdwg.mxu0
        %v1054 = vsel %vm886, %v1051, -inf
        %1055 = vmax.xlane.f32.xlu0 %v1054
        %v1056 = vpop.xlane.xlu0 %1055
        %v1057 = vsub.f32 %v1051, %v1056
        %v1058 = vmul.f32 %v1057, 1.442695
        %v1059 = vpow.pop %v1058
        %v1060 = vsel %vm886, %v1059, 0.0
        %1061 = vadd.xlane.f32.xlu0 %v1060
        %v1062 = vpop.xlane.xlu0 %1061
        %v1063 = vrcp.pop %v1062
        %v1064 = vmul.f32 %v1059, %v1063
        %s1065 = scalar_lea.vmem %s542, 8 [#allocation14]
        %1066 = vst.msk [vmem:[%s1065] sm:$0xff] %vm886, %v1064
        %1068 = vrot.lane.b32.xlu0 %v974, 112
        %v1069 = vpop.permute.xlu0 %1068
        %v1072 = vsel %vm886, %v1064, 0
        %1074 = vmatprep.subr.mxu0 0.0
        %1075 = vmatpush1.msra.mxu0 %v1069
        %1076 = vmatprep.subr.mxu0 0.0
        %1077 = vmatpush1.msra.mxu0 0.0
        %1078 = vmatprep.subr.mxu0 0.0
        %1079 = vmatpush1.msra.mxu0 0.0
        %1080 = vmatprep.subr.mxu0 0.0
        %1081 = vmatpush1.msra.mxu0 0.0
        %1082 = vmatprep.subr.mxu0 0.0
        %1083 = vmatpush1.msra.mxu0 0.0
        %1084 = vmatprep.subr.mxu0 0.0
        %1085 = vmatpush1.msra.mxu0 0.0
        %1086 = vmatprep.subr.mxu0 0.0
        %1087 = vmatpush1.msra.mxu0 0.0
        %1088 = vmatprep.subr.mxu0 0.0
        %1089 = vmatpush1.msra.mxu0 0.0
        %1090 = vmatprep.subr.mxu0 0.0
        %1091 = vmatpush1.msra.mxu0 0.0
        %1092 = vmatprep.subr.mxu0 0.0
        %1093 = vmatpush1.msra.mxu0 0.0
        %1094 = vmatprep.subr.mxu0 0.0
        %1095 = vmatpush1.msra.mxu0 0.0
        %1096 = vmatprep.subr.mxu0 0.0
        %1097 = vmatpush1.msra.mxu0 0.0
        %1098 = vmatprep.subr.mxu0 0.0
        %1099 = vmatpush1.msra.mxu0 0.0
        %1100 = vmatprep.subr.mxu0 0.0
        %1101 = vmatpush1.msra.mxu0 0.0
        %1102 = vmatprep.subr.mxu0 0.0
        %1103 = vmatpush1.msra.mxu0 0.0
        %1104 = vmatprep.subr.mxu0 0.0
        %1105 = vmatpush1.msra.mxu0 0.0
        %1106 = vmatprep.subr.mxu0 0.0
        %1107 = vmatpush1.msra.mxu0 0.0
        %1108 = vmatprep.subr.mxu0 0.0
        %1109 = vmatpush1.msra.mxu0 0.0
        %1110 = vmatprep.subr.mxu0 0.0
        %1111 = vmatpush1.msra.mxu0 0.0
        %1112 = vmatprep.subr.mxu0 0.0
        %1113 = vmatpush1.msra.mxu0 0.0
        %1114 = vmatprep.subr.mxu0 0.0
        %1115 = vmatpush1.msra.mxu0 0.0
        %1116 = vmatprep.subr.mxu0 0.0
        %1117 = vmatpush1.msra.mxu0 0.0
        %1118 = vmatprep.subr.mxu0 0.0
        %1119 = vmatpush1.msra.mxu0 0.0
        %1120 = vmatprep.subr.mxu0 0.0
        %1121 = vmatpush1.msra.mxu0 0.0
        %1122 = vmatprep.subr.mxu0 0.0
        %1123 = vmatpush1.msra.mxu0 0.0
        %1124 = vmatprep.subr.mxu0 0.0
        %1125 = vmatpush1.msra.mxu0 0.0
        %1126 = vmatprep.subr.mxu0 0.0
        %1127 = vmatpush1.msra.mxu0 0.0
        %1128 = vmatprep.subr.mxu0 0.0
        %1129 = vmatpush1.msra.mxu0 0.0
        %1130 = vmatprep.subr.mxu0 0.0
        %1131 = vmatpush1.msra.mxu0 0.0
        %1132 = vmatprep.subr.mxu0 0.0
        %1133 = vmatpush1.msra.mxu0 0.0
        %1134 = vmatprep.subr.mxu0 0.0
        %1135 = vmatpush1.msra.mxu0 0.0
        %1136 = vmatprep.subr.mxu0 0.0
        %1137 = vmatpush1.msra.mxu0 0.0
        %1138 = vmatprep.mubr.f32.mxu0 0.0
        %1139 = vmatmul.mubr.f32.gmra.mrb[0].mxu0 %v1072
        %v1140 = vpop.f32.mrb[0].mxu0
        %v1141 = vadd.f32 0.0, %v1140
        %v1142 = vpop.f32.mrb[0].mxu0
        %1143 = vdwg.mxu0
        %1145 = vrot.lane.b32.xlu0 %v1141, 16
        %v1146 = vpop.permute.xlu0 %1145
        %vm1148 = vcmask 261248
        %1149 = vst.msk [vmem:[#allocation4] sm:$0xff] %vm1148, %v1146
        %v1150 = vld [vmem:[#allocation2] sm:$0xff]
        %v1151 = vld [vmem:[#allocation3] sm:$0xff]
        %1152 = vrot.lane.b32.xlu0 %v804, 96
        %v1153 = vpop.permute.xlu0 %1152
        %1155 = vrot.lane.b32.xlu0 %v1150, 96
        %v1156 = vpop.permute.xlu0 %1155
        %v1157 = vsel %vm809, %v1153, 0
        %v1159 = vsel %vm809, %v1156, 0
        %1161 = vmatprep.subr.mxu0 0.0
        %1162 = vmatpush1.xpose.msra.mxu0 %v1159
        %1163 = vmatprep.subr.mxu0 0.0
        %1164 = vmatpush1.xpose.msra.mxu0 0.0
        %1165 = vmatprep.subr.mxu0 0.0
        %1166 = vmatpush1.xpose.msra.mxu0 0.0
        %1167 = vmatprep.subr.mxu0 0.0
        %1168 = vmatpush1.xpose.msra.mxu0 0.0
        %1169 = vmatprep.subr.mxu0 0.0
        %1170 = vmatpush1.xpose.msra.mxu0 0.0
        %1171 = vmatprep.subr.mxu0 0.0
        %1172 = vmatpush1.xpose.msra.mxu0 0.0
        %1173 = vmatprep.subr.mxu0 0.0
        %1174 = vmatpush1.xpose.msra.mxu0 0.0
        %1175 = vmatprep.subr.mxu0 0.0
        %1176 = vmatpush1.xpose.msra.mxu0 0.0
        %1177 = vmatprep.subr.mxu0 0.0
        %1178 = vmatpush1.xpose.msra.mxu0 0.0
        %1179 = vmatprep.subr.mxu0 0.0
        %1180 = vmatpush1.xpose.msra.mxu0 0.0
        %1181 = vmatprep.subr.mxu0 0.0
        %1182 = vmatpush1.xpose.msra.mxu0 0.0
        %1183 = vmatprep.subr.mxu0 0.0
        %1184 = vmatpush1.xpose.msra.mxu0 0.0
        %1185 = vmatprep.subr.mxu0 0.0
        %1186 = vmatpush1.xpose.msra.mxu0 0.0
        %1187 = vmatprep.subr.mxu0 0.0
        %1188 = vmatpush1.xpose.msra.mxu0 0.0
        %1189 = vmatprep.subr.mxu0 0.0
        %1190 = vmatpush1.xpose.msra.mxu0 0.0
        %1191 = vmatprep.subr.mxu0 0.0
        %1192 = vmatpush1.xpose.msra.mxu0 0.0
        %1193 = vmatprep.subr.mxu0 0.0
        %1194 = vmatpush1.xpose.msra.mxu0 0.0
        %1195 = vmatprep.subr.mxu0 0.0
        %1196 = vmatpush1.xpose.msra.mxu0 0.0
        %1197 = vmatprep.subr.mxu0 0.0
        %1198 = vmatpush1.xpose.msra.mxu0 0.0
        %1199 = vmatprep.subr.mxu0 0.0
        %1200 = vmatpush1.xpose.msra.mxu0 0.0
        %1201 = vmatprep.subr.mxu0 0.0
        %1202 = vmatpush1.xpose.msra.mxu0 0.0
        %1203 = vmatprep.subr.mxu0 0.0
        %1204 = vmatpush1.xpose.msra.mxu0 0.0
        %1205 = vmatprep.subr.mxu0 0.0
        %1206 = vmatpush1.xpose.msra.mxu0 0.0
        %1207 = vmatprep.subr.mxu0 0.0
        %1208 = vmatpush1.xpose.msra.mxu0 0.0
        %1209 = vmatprep.subr.mxu0 0.0
        %1210 = vmatpush1.xpose.msra.mxu0 0.0
        %1211 = vmatprep.subr.mxu0 0.0
        %1212 = vmatpush1.xpose.msra.mxu0 0.0
        %1213 = vmatprep.subr.mxu0 0.0
        %1214 = vmatpush1.xpose.msra.mxu0 0.0
        %1215 = vmatprep.subr.mxu0 0.0
        %1216 = vmatpush1.xpose.msra.mxu0 0.0
        %1217 = vmatprep.subr.mxu0 0.0
        %1218 = vmatpush1.xpose.msra.mxu0 0.0
        %1219 = vmatprep.subr.mxu0 0.0
        %1220 = vmatpush1.xpose.msra.mxu0 0.0
        %1221 = vmatprep.subr.mxu0 0.0
        %1222 = vmatpush1.xpose.msra.mxu0 0.0
        %1223 = vmatprep.subr.mxu0 0.0
        %1224 = vmatpush1.xpose.msra.mxu0 0.0
        %1225 = vmatprep.mubr.f32.mxu0 0.0
        %1226 = vmatmul.mubr.f32.gmra.mrb[0].mxu0 %v1157
        %v1227 = vpop.f32.mrb[0].mxu0
        %v1228 = vadd.f32 0.0, %v1227
        %v1229 = vpop.f32.mrb[0].mxu0
        %1230 = vdwg.mxu0
        %v1231 = vsel %vm886, %v1228, -inf
        %1232 = vmax.xlane.f32.xlu0 %v1231
        %v1233 = vpop.xlane.xlu0 %1232
        %v1234 = vsub.f32 %v1228, %v1233
        %v1235 = vmul.f32 %v1234, 1.442695
        %v1236 = vpow.pop %v1235
        %v1237 = vsel %vm886, %v1236, 0.0
        %1238 = vadd.xlane.f32.xlu0 %v1237
        %v1239 = vpop.xlane.xlu0 %1238
        %v1240 = vrcp.pop %v1239
        %v1241 = vmul.f32 %v1236, %v1240
        %s1242 = scalar_lea.vmem %s542, 16 [#allocation14]
        %1243 = vst.msk [vmem:[%s1242] sm:$0xff] %vm886, %v1241
        %1245 = vrot.lane.b32.xlu0 %v1151, 96
        %v1246 = vpop.permute.xlu0 %1245
        %v1249 = vsel %vm886, %v1241, 0
        %1251 = vmatprep.subr.mxu0 0.0
        %1252 = vmatpush1.msra.mxu0 %v1246
        %1253 = vmatprep.subr.mxu0 0.0
        %1254 = vmatpush1.msra.mxu0 0.0
        %1255 = vmatprep.subr.mxu0 0.0
        %1256 = vmatpush1.msra.mxu0 0.0
        %1257 = vmatprep.subr.mxu0 0.0
        %1258 = vmatpush1.msra.mxu0 0.0
        %1259 = vmatprep.subr.mxu0 0.0
        %1260 = vmatpush1.msra.mxu0 0.0
        %1261 = vmatprep.subr.mxu0 0.0
        %1262 = vmatpush1.msra.mxu0 0.0
        %1263 = vmatprep.subr.mxu0 0.0
        %1264 = vmatpush1.msra.mxu0 0.0
        %1265 = vmatprep.subr.mxu0 0.0
        %1266 = vmatpush1.msra.mxu0 0.0
        %1267 = vmatprep.subr.mxu0 0.0
        %1268 = vmatpush1.msra.mxu0 0.0
        %1269 = vmatprep.subr.mxu0 0.0
        %1270 = vmatpush1.msra.mxu0 0.0
        %1271 = vmatprep.subr.mxu0 0.0
        %1272 = vmatpush1.msra.mxu0 0.0
        %1273 = vmatprep.subr.mxu0 0.0
        %1274 = vmatpush1.msra.mxu0 0.0
        %1275 = vmatprep.subr.mxu0 0.0
        %1276 = vmatpush1.msra.mxu0 0.0
        %1277 = vmatprep.subr.mxu0 0.0
        %1278 = vmatpush1.msra.mxu0 0.0
        %1279 = vmatprep.subr.mxu0 0.0
        %1280 = vmatpush1.msra.mxu0 0.0
        %1281 = vmatprep.subr.mxu0 0.0
        %1282 = vmatpush1.msra.mxu0 0.0
        %1283 = vmatprep.subr.mxu0 0.0
        %1284 = vmatpush1.msra.mxu0 0.0
        %1285 = vmatprep.subr.mxu0 0.0
        %1286 = vmatpush1.msra.mxu0 0.0
        %1287 = vmatprep.subr.mxu0 0.0
        %1288 = vmatpush1.msra.mxu0 0.0
        %1289 = vmatprep.subr.mxu0 0.0
        %1290 = vmatpush1.msra.mxu0 0.0
        %1291 = vmatprep.subr.mxu0 0.0
        %1292 = vmatpush1.msra.mxu0 0.0
        %1293 = vmatprep.subr.mxu0 0.0
        %1294 = vmatpush1.msra.mxu0 0.0
        %1295 = vmatprep.subr.mxu0 0.0
        %1296 = vmatpush1.msra.mxu0 0.0
        %1297 = vmatprep.subr.mxu0 0.0
        %1298 = vmatpush1.msra.mxu0 0.0
        %1299 = vmatprep.subr.mxu0 0.0
        %1300 = vmatpush1.msra.mxu0 0.0
        %1301 = vmatprep.subr.mxu0 0.0
        %1302 = vmatpush1.msra.mxu0 0.0
        %1303 = vmatprep.subr.mxu0 0.0
        %1304 = vmatpush1.msra.mxu0 0.0
        %1305 = vmatprep.subr.mxu0 0.0
        %1306 = vmatpush1.msra.mxu0 0.0
        %1307 = vmatprep.subr.mxu0 0.0
        %1308 = vmatpush1.msra.mxu0 0.0
        %1309 = vmatprep.subr.mxu0 0.0
        %1310 = vmatpush1.msra.mxu0 0.0
        %1311 = vmatprep.subr.mxu0 0.0
        %1312 = vmatpush1.msra.mxu0 0.0
        %1313 = vmatprep.subr.mxu0 0.0
        %1314 = vmatpush1.msra.mxu0 0.0
        %1315 = vmatprep.mubr.f32.mxu0 0.0
        %1316 = vmatmul.mubr.f32.gmra.mrb[0].mxu0 %v1249
        %v1317 = vpop.f32.mrb[0].mxu0
        %v1318 = vadd.f32 0.0, %v1317
        %v1319 = vpop.f32.mrb[0].mxu0
        %1320 = vdwg.mxu0
        %1322 = vrot.lane.b32.xlu0 %v1318, 32
        %v1323 = vpop.permute.xlu0 %1322
        %vm1325 = vcmask 392448
        %1326 = vst.msk [vmem:[#allocation4] sm:$0xff] %vm1325, %v1323
        %v1327 = vld [vmem:[#allocation2] sm:$0xff]
        %v1328 = vld [vmem:[#allocation3] sm:$0xff]
        %1329 = vrot.lane.b32.xlu0 %v804, 80
        %v1330 = vpop.permute.xlu0 %1329
        %1332 = vrot.lane.b32.xlu0 %v1327, 80
        %v1333 = vpop.permute.xlu0 %1332
        %v1334 = vsel %vm809, %v1330, 0
        %v1336 = vsel %vm809, %v1333, 0
        %1338 = vmatprep.subr.mxu0 0.0
        %1339 = vmatpush1.xpose.msra.mxu0 %v1336
        %1340 = vmatprep.subr.mxu0 0.0
        %1341 = vmatpush1.xpose.msra.mxu0 0.0
        %1342 = vmatprep.subr.mxu0 0.0
        %1343 = vmatpush1.xpose.msra.mxu0 0.0
        %1344 = vmatprep.subr.mxu0 0.0
        %1345 = vmatpush1.xpose.msra.mxu0 0.0
        %1346 = vmatprep.subr.mxu0 0.0
        %1347 = vmatpush1.xpose.msra.mxu0 0.0
        %1348 = vmatprep.subr.mxu0 0.0
        %1349 = vmatpush1.xpose.msra.mxu0 0.0
        %1350 = vmatprep.subr.mxu0 0.0
        %1351 = vmatpush1.xpose.msra.mxu0 0.0
        %1352 = vmatprep.subr.mxu0 0.0
        %1353 = vmatpush1.xpose.msra.mxu0 0.0
        %1354 = vmatprep.subr.mxu0 0.0
        %1355 = vmatpush1.xpose.msra.mxu0 0.0
        %1356 = vmatprep.subr.mxu0 0.0
        %1357 = vmatpush1.xpose.msra.mxu0 0.0
        %1358 = vmatprep.subr.mxu0 0.0
        %1359 = vmatpush1.xpose.msra.mxu0 0.0
        %1360 = vmatprep.subr.mxu0 0.0
        %1361 = vmatpush1.xpose.msra.mxu0 0.0
        %1362 = vmatprep.subr.mxu0 0.0
        %1363 = vmatpush1.xpose.msra.mxu0 0.0
        %1364 = vmatprep.subr.mxu0 0.0
        %1365 = vmatpush1.xpose.msra.mxu0 0.0
        %1366 = vmatprep.subr.mxu0 0.0
        %1367 = vmatpush1.xpose.msra.mxu0 0.0
        %1368 = vmatprep.subr.mxu0 0.0
        %1369 = vmatpush1.xpose.msra.mxu0 0.0
        %1370 = vmatprep.subr.mxu0 0.0
        %1371 = vmatpush1.xpose.msra.mxu0 0.0
        %1372 = vmatprep.subr.mxu0 0.0
        %1373 = vmatpush1.xpose.msra.mxu0 0.0
        %1374 = vmatprep.subr.mxu0 0.0
        %1375 = vmatpush1.xpose.msra.mxu0 0.0
        %1376 = vmatprep.subr.mxu0 0.0
        %1377 = vmatpush1.xpose.msra.mxu0 0.0
        %1378 = vmatprep.subr.mxu0 0.0
        %1379 = vmatpush1.xpose.msra.mxu0 0.0
        %1380 = vmatprep.subr.mxu0 0.0
        %1381 = vmatpush1.xpose.msra.mxu0 0.0
        %1382 = vmatprep.subr.mxu0 0.0
        %1383 = vmatpush1.xpose.msra.mxu0 0.0
        %1384 = vmatprep.subr.mxu0 0.0
        %1385 = vmatpush1.xpose.msra.mxu0 0.0
        %1386 = vmatprep.subr.mxu0 0.0
        %1387 = vmatpush1.xpose.msra.mxu0 0.0
        %1388 = vmatprep.subr.mxu0 0.0
        %1389 = vmatpush1.xpose.msra.mxu0 0.0
        %1390 = vmatprep.subr.mxu0 0.0
        %1391 = vmatpush1.xpose.msra.mxu0 0.0
        %1392 = vmatprep.subr.mxu0 0.0
        %1393 = vmatpush1.xpose.msra.mxu0 0.0
        %1394 = vmatprep.subr.mxu0 0.0
        %1395 = vmatpush1.xpose.msra.mxu0 0.0
        %1396 = vmatprep.subr.mxu0 0.0
        %1397 = vmatpush1.xpose.msra.mxu0 0.0
        %1398 = vmatprep.subr.mxu0 0.0
        %1399 = vmatpush1.xpose.msra.mxu0 0.0
        %1400 = vmatprep.subr.mxu0 0.0
        %1401 = vmatpush1.xpose.msra.mxu0 0.0
        %1402 = vmatprep.mubr.f32.mxu0 0.0
        %1403 = vmatmul.mubr.f32.gmra.mrb[0].mxu0 %v1334
        %v1404 = vpop.f32.mrb[0].mxu0
        %v1405 = vadd.f32 0.0, %v1404
        %v1406 = vpop.f32.mrb[0].mxu0
        %1407 = vdwg.mxu0
        %v1408 = vsel %vm886, %v1405, -inf
        %1409 = vmax.xlane.f32.xlu0 %v1408
        %v1410 = vpop.xlane.xlu0 %1409
        %v1411 = vsub.f32 %v1405, %v1410
        %v1412 = vmul.f32 %v1411, 1.442695
        %v1413 = vpow.pop %v1412
        %v1414 = vsel %vm886, %v1413, 0.0
        %1415 = vadd.xlane.f32.xlu0 %v1414
        %v1416 = vpop.xlane.xlu0 %1415
        %v1417 = vrcp.pop %v1416
        %v1418 = vmul.f32 %v1413, %v1417
        %s1419 = scalar_lea.vmem %s542, 24 [#allocation14]
        %1420 = vst.msk [vmem:[%s1419] sm:$0xff] %vm886, %v1418
        %1422 = vrot.lane.b32.xlu0 %v1328, 80
        %v1423 = vpop.permute.xlu0 %1422
        %v1426 = vsel %vm886, %v1418, 0
        %1428 = vmatprep.subr.mxu0 0.0
        %1429 = vmatpush1.msra.mxu0 %v1423
        %1430 = vmatprep.subr.mxu0 0.0
        %1431 = vmatpush1.msra.mxu0 0.0
        %1432 = vmatprep.subr.mxu0 0.0
        %1433 = vmatpush1.msra.mxu0 0.0
        %1434 = vmatprep.subr.mxu0 0.0
        %1435 = vmatpush1.msra.mxu0 0.0
        %1436 = vmatprep.subr.mxu0 0.0
        %1437 = vmatpush1.msra.mxu0 0.0
        %1438 = vmatprep.subr.mxu0 0.0
        %1439 = vmatpush1.msra.mxu0 0.0
        %1440 = vmatprep.subr.mxu0 0.0
        %1441 = vmatpush1.msra.mxu0 0.0
        %1442 = vmatprep.subr.mxu0 0.0
        %1443 = vmatpush1.msra.mxu0 0.0
        %1444 = vmatprep.subr.mxu0 0.0
        %1445 = vmatpush1.msra.mxu0 0.0
        %1446 = vmatprep.subr.mxu0 0.0
        %1447 = vmatpush1.msra.mxu0 0.0
        %1448 = vmatprep.subr.mxu0 0.0
        %1449 = vmatpush1.msra.mxu0 0.0
        %1450 = vmatprep.subr.mxu0 0.0
        %1451 = vmatpush1.msra.mxu0 0.0
        %1452 = vmatprep.subr.mxu0 0.0
        %1453 = vmatpush1.msra.mxu0 0.0
        %1454 = vmatprep.subr.mxu0 0.0
        %1455 = vmatpush1.msra.mxu0 0.0
        %1456 = vmatprep.subr.mxu0 0.0
        %1457 = vmatpush1.msra.mxu0 0.0
        %1458 = vmatprep.subr.mxu0 0.0
        %1459 = vmatpush1.msra.mxu0 0.0
        %1460 = vmatprep.subr.mxu0 0.0
        %1461 = vmatpush1.msra.mxu0 0.0
        %1462 = vmatprep.subr.mxu0 0.0
        %1463 = vmatpush1.msra.mxu0 0.0
        %1464 = vmatprep.subr.mxu0 0.0
        %1465 = vmatpush1.msra.mxu0 0.0
        %1466 = vmatprep.subr.mxu0 0.0
        %1467 = vmatpush1.msra.mxu0 0.0
        %1468 = vmatprep.subr.mxu0 0.0
        %1469 = vmatpush1.msra.mxu0 0.0
        %1470 = vmatprep.subr.mxu0 0.0
        %1471 = vmatpush1.msra.mxu0 0.0
        %1472 = vmatprep.subr.mxu0 0.0
        %1473 = vmatpush1.msra.mxu0 0.0
        %1474 = vmatprep.subr.mxu0 0.0
        %1475 = vmatpush1.msra.mxu0 0.0
        %1476 = vmatprep.subr.mxu0 0.0
        %1477 = vmatpush1.msra.mxu0 0.0
        %1478 = vmatprep.subr.mxu0 0.0
        %1479 = vmatpush1.msra.mxu0 0.0
        %1480 = vmatprep.subr.mxu0 0.0
        %1481 = vmatpush1.msra.mxu0 0.0
        %1482 = vmatprep.subr.mxu0 0.0
        %1483 = vmatpush1.msra.mxu0 0.0
        %1484 = vmatprep.subr.mxu0 0.0
        %1485 = vmatpush1.msra.mxu0 0.0
        %1486 = vmatprep.subr.mxu0 0.0
        %1487 = vmatpush1.msra.mxu0 0.0
        %1488 = vmatprep.subr.mxu0 0.0
        %1489 = vmatpush1.msra.mxu0 0.0
        %1490 = vmatprep.subr.mxu0 0.0
        %1491 = vmatpush1.msra.mxu0 0.0
        %1492 = vmatprep.mubr.f32.mxu0 0.0
        %1493 = vmatmul.mubr.f32.gmra.mrb[0].mxu0 %v1426
        %v1494 = vpop.f32.mrb[0].mxu0
        %v1495 = vadd.f32 0.0, %v1494
        %v1496 = vpop.f32.mrb[0].mxu0
        %1497 = vdwg.mxu0
        %1499 = vrot.lane.b32.xlu0 %v1495, 48
        %v1500 = vpop.permute.xlu0 %1499
        %vm1502 = vcmask 523648
        %1503 = vst.msk [vmem:[#allocation4] sm:$0xff] %vm1502, %v1500
        %v1504 = vld [vmem:[#allocation4] sm:$0xff]
        %v1505 = vld [vmem:[%s9] sm:$0xff]
        %v1506 = vld [vmem:[%s9 + $0x8] sm:$0xff]
        %v1507 = vld [vmem:[%s9 + $0x10] sm:$0xff]
        %v1508 = vld [vmem:[%s9 + $0x18] sm:$0xff]
        %v1509 = vld [vmem:[%s9 + $0x20] sm:$0xff]
        %v1510 = vld [vmem:[%s9 + $0x28] sm:$0xff]
        %v1511 = vld [vmem:[%s9 + $0x30] sm:$0xff]
        %v1512 = vld [vmem:[%s9 + $0x38] sm:$0xff]
        %v1513 = vld [vmem:[%s10] sm:$0x1]
        %v1515 = vlaneseq
        %v1516 = vshrl.u32 %v1515, 7
        %v1517 = vsub.s32 0, %v1516
        %v1518 = vrot.slane %v1513, %v1517
        %vm1520 = vcmask 523264
        %v1522 = vsel %vm1520, %v1504, 0
        %1524 = vmatprep.subr.mxu0 0.0
        %1525 = vmatpush1.msra.mxu0 %v1505
        %1526 = vmatprep.subr.mxu0 0.0
        %1527 = vmatpush1.msra.mxu0 %v1506
        %1528 = vmatprep.subr.mxu0 0.0
        %1529 = vmatpush1.msra.mxu0 %v1507
        %1530 = vmatprep.subr.mxu0 0.0
        %1531 = vmatpush1.msra.mxu0 %v1508
        %1532 = vmatprep.subr.mxu0 0.0
        %1533 = vmatpush1.msra.mxu0 %v1509
        %1534 = vmatprep.subr.mxu0 0.0
        %1535 = vmatpush1.msra.mxu0 %v1510
        %1536 = vmatprep.subr.mxu0 0.0
        %1537 = vmatpush1.msra.mxu0 %v1511
        %1538 = vmatprep.subr.mxu0 0.0
        %1539 = vmatpush1.msra.mxu0 %v1512
        %1540 = vmatprep.subr.mxu0 0.0
        %1541 = vmatpush1.msra.mxu0 0.0
        %1542 = vmatprep.subr.mxu0 0.0
        %1543 = vmatpush1.msra.mxu0 0.0
        %1544 = vmatprep.subr.mxu0 0.0
        %1545 = vmatpush1.msra.mxu0 0.0
        %1546 = vmatprep.subr.mxu0 0.0
        %1547 = vmatpush1.msra.mxu0 0.0
        %1548 = vmatprep.subr.mxu0 0.0
        %1549 = vmatpush1.msra.mxu0 0.0
        %1550 = vmatprep.subr.mxu0 0.0
        %1551 = vmatpush1.msra.mxu0 0.0
        %1552 = vmatprep.subr.mxu0 0.0
        %1553 = vmatpush1.msra.mxu0 0.0
        %1554 = vmatprep.subr.mxu0 0.0
        %1555 = vmatpush1.msra.mxu0 0.0
        %1556 = vmatprep.subr.mxu0 0.0
        %1557 = vmatpush1.msra.mxu0 0.0
        %1558 = vmatprep.subr.mxu0 0.0
        %1559 = vmatpush1.msra.mxu0 0.0
        %1560 = vmatprep.subr.mxu0 0.0
        %1561 = vmatpush1.msra.mxu0 0.0
        %1562 = vmatprep.subr.mxu0 0.0
        %1563 = vmatpush1.msra.mxu0 0.0
        %1564 = vmatprep.subr.mxu0 0.0
        %1565 = vmatpush1.msra.mxu0 0.0
        %1566 = vmatprep.subr.mxu0 0.0
        %1567 = vmatpush1.msra.mxu0 0.0
        %1568 = vmatprep.subr.mxu0 0.0
        %1569 = vmatpush1.msra.mxu0 0.0
        %1570 = vmatprep.subr.mxu0 0.0
        %1571 = vmatpush1.msra.mxu0 0.0
        %1572 = vmatprep.subr.mxu0 0.0
        %1573 = vmatpush1.msra.mxu0 0.0
        %1574 = vmatprep.subr.mxu0 0.0
        %1575 = vmatpush1.msra.mxu0 0.0
        %1576 = vmatprep.subr.mxu0 0.0
        %1577 = vmatpush1.msra.mxu0 0.0
        %1578 = vmatprep.subr.mxu0 0.0
        %1579 = vmatpush1.msra.mxu0 0.0
        %1580 = vmatprep.subr.mxu0 0.0
        %1581 = vmatpush1.msra.mxu0 0.0
        %1582 = vmatprep.subr.mxu0 0.0
        %1583 = vmatpush1.msra.mxu0 0.0
        %1584 = vmatprep.subr.mxu0 0.0
        %1585 = vmatpush1.msra.mxu0 0.0
        %1586 = vmatprep.subr.mxu0 0.0
        %1587 = vmatpush1.msra.mxu0 0.0
        %1588 = vmatprep.mubr.f32.mxu0 0.0
        %1589 = vmatmul.mubr.f32.gmra.mrb[0].mxu0 %v1522
        %v1590 = vpop.f32.mrb[0].mxu0
        %v1591 = vadd.f32 %v1518, %v1590
        %v1592 = vpop.f32.mrb[0].mxu0
        %1593 = vdwg.mxu0
        %1594 = vst.msk [vmem:[%s535] sm:$0xff] %vm733, %v1591
        %s1595 = sand.u32 %s307, 1
        %s1596 = scalar_lea.sflag [#allocation7], %s1595
        %s1597 = sand.u32 %s307, 1
        %s1598 = smul.addr %s1597, 8
        %s1599 = scalar_lea.vmem [#allocation13], %s1598
        %s1600 = sand.u32 %s335, 1
        %s1601 = scalar_lea.sflag [#allocation15], %s1600
        %s1602 = sand.u32 %s335, 1
        %s1603 = smul.addr %s1602, 32
        %s1604 = scalar_lea.vmem [#allocation14], %s1603
        // Predicated region
        $region85: #{tpu_custom_call.1} parent=63 // pred_check
          %p1605 = pneg %p317
        $region86: #{tpu_custom_call.1} parent=63 // pred_check_branch
          %1607 = sbr.rel (%p1605) target = $region88
        $region87: #{tpu_custom_call.1} parent=63 // pred_region
          %s1609 = ssub.s32 128, 128
          %1610 = vsyncadd %s1596, %s1609
          %s1611 = sadd.s32 %s42, %s41
          %s1612 = smul.addr %s1611, 128
          %s1613 = scalar_lea.hbm %s11, %s1612
          %s1615 = sshll.u32 %s1599, 4
          %s1616 = int_to_ptr.vmem [resolvable:$true] %s1615
          %1618 = dma.vmem_to_hbm [thread:$0]  %s1616, 128, %s1613, %s1596
        $region88: #{tpu_custom_call.1} parent=63 // pred_fallthru
          _
        // Predicated region
        $region89: #{tpu_custom_call.1} parent=63 // pred_check
          %p1619 = pneg %p345
        $region90: #{tpu_custom_call.1} parent=63 // pred_check_branch
          %1621 = sbr.rel (%p1619) target = $region92
        $region91: #{tpu_custom_call.1} parent=63 // pred_region
          %s1623 = ssub.s32 512, 512
          %1624 = vsyncadd %s1601, %s1623
          %s1625 = smul.addr %s41, 4
          %s1626 = sadd.s32 %s42, %s1625
          %s1627 = smul.addr %s1626, 128
          %s1628 = scalar_lea.hbm %s12, %s1627
          %s1629 = sshll.u32 %s1604, 4
          %s1630 = int_to_ptr.vmem [resolvable:$true] %s1629
          %1635 = dma.vmem_to_hbm [thread:$0]  %s1630, 512, %s1628, %s1601, 128, 128, 8
        $region92: #{tpu_custom_call.1} parent=63 // pred_fallthru
          _
      $region64: #{tpu_custom_call.1} parent=5 // pred_fallthru
        _
      %p1636 = scmp.le.s32.totalorder 2, %s32
      // Predicated region
      $region93: #{tpu_custom_call.1} parent=5 // pred_check
        %p1637 = pneg %p1636
      $region94: #{tpu_custom_call.1} parent=5 // pred_check_branch
        %1639 = sbr.rel (%p1637) target = $region96
      $region95: #{tpu_custom_call.1} parent=5 // pred_region
        %s1640 = ssub.s32 %s32, 2
        // Predicated region
        $region97: #{tpu_custom_call.1} parent=95 // pred_check
          %p1641 = pneg %p323
        $region98: #{tpu_custom_call.1} parent=95 // pred_check_branch
          %1643 = sbr.rel (%p1641) target = $region100
        $region99: #{tpu_custom_call.1} parent=95 // pred_region
          %s1644 = sand.u32 %s308, 1
          %s1645 = scalar_lea.sflag [#allocation7], %s1644
          %s1646 = sand.u32 %s308, 1
          %s1647 = smul.addr %s1646, 8
          %s1648 = scalar_lea.vmem [#allocation13], %s1647
          %1649 = dma.done %s1645, 128
        $region100: #{tpu_custom_call.1} parent=95 // pred_fallthru
          _
        // Predicated region
        $region101: #{tpu_custom_call.1} parent=95 // pred_check
          %p1650 = pneg %p351
        $region102: #{tpu_custom_call.1} parent=95 // pred_check_branch
          %1652 = sbr.rel (%p1650) target = $region104
        $region103: #{tpu_custom_call.1} parent=95 // pred_region
          %s1653 = sand.u32 %s336, 1
          %s1654 = scalar_lea.sflag [#allocation15], %s1653
          %s1655 = sand.u32 %s336, 1
          %s1656 = smul.addr %s1655, 32
          %s1657 = scalar_lea.vmem [#allocation14], %s1656
          %1658 = dma.done %s1654, 512
        $region104: #{tpu_custom_call.1} parent=95 // pred_fallthru
          _
      $region96: #{tpu_custom_call.1} parent=5 // pred_fallthru
        _
    $region6: #{tpu_custom_call.1} parent=1 // loop_footer
      %s36 = sadd.s32 1, %s32
    $region7: #{tpu_custom_call.1} parent=1 // loop_footer_branch
      %31 = sbr.rel target = $region3
    $region8: #{tpu_custom_call.1} parent=1 // loop_exit
      _
    %1659 = vsyncpa [#allocation6], 1
    %s1660 = scalar_lea.sflag [#allocation6], 1
    %1661 = vsyncpa %s1660, 1
    %1662 = vsyncpa [#allocation9], 1
    %s1663 = scalar_lea.sflag [#allocation9], 1
    %1664 = vsyncpa %s1663, 1
    %1665 = vsyncpa [#allocation12], 1
    %1666 = vsyncpa [#allocation7], 1
    %s1667 = scalar_lea.sflag [#allocation7], 1
    %1668 = vsyncpa %s1667, 1
    %1669 = vsyncpa [#allocation15], 1
    %s1670 = scalar_lea.sflag [#allocation15], 1
    %1671 = vsyncpa %s1670, 1

</llo_original>
